<compile_context>
chip_gen: v6e
topology: v6e:2x2x1
jax: 0.10.0
libtpu: 0.0.40
codegen_flags: <defaults>
</compile_context>

<pallas_src>
import functools

import jax
import jax.numpy as jnp
from jax.experimental import pallas as pl
from jax.experimental.pallas import tpu as pltpu


# ----------------------------------------------------------------------------
# Pallas kernels
# ----------------------------------------------------------------------------

def _conv3x3_relu_kernel(x_ref, w_ref, b_ref, o_ref, *scratch,
                         pool, single_matmul):
    """3x3 SAME conv + bias + ReLU (+ optional fused 2x2/2 maxpool), one image.

    x_ref : (H, W, Cin)              bf16 activations
    w_ref : (9*Cin, Cout) bf16 if single_matmul else (3, 3*Cin, Cout) bf16
    b_ref : (1, Cout)                f32
    o_ref : (Ho, Wo, Cout)           bf16  (Ho,Wo = H,W, or H/2,W/2 if pooled)
    scratch[0] : (H+2, W+2, Cin) f32 zero-padded input (halo built in VMEM)
    scratch[1] : (H, W, Cout)    f32 pre-pool buffer (only when pool=True)
    """
    xp_ref = scratch[0]
    H, W, Cin = x_ref.shape
    Cout = b_ref.shape[-1]

    # In-kernel halo: zero the padded scratch, drop the tile in its middle.
    # (f32 scratch avoids unaligned packed-bf16 sub-word stores.)
    xp_ref[...] = jnp.zeros_like(xp_ref)
    xp_ref[1:H + 1, 1:W + 1, :] = x_ref[...].astype(xp_ref.dtype)
    xp = xp_ref[...]

    # Accumulator starts as the broadcast bias (no separate bias add later).
    acc = jnp.broadcast_to(b_ref[...], (H * W, Cout)).astype(jnp.float32)

    if single_matmul:
        # Tiny Cin (first layer): full in-register im2col, one K=9*Cin matmul.
        cols = [xp[dy:dy + H, dx:dx + W, :]
                for dy in range(3) for dx in range(3)]
        patch = jnp.concatenate(cols, axis=-1).reshape(H * W, 9 * Cin)
        acc = acc + jnp.dot(patch.astype(jnp.bfloat16), w_ref[...],
                            preferred_element_type=jnp.float32)
    else:
        # Three matmuls with K = 3*Cin: concat dx-shifted windows on channels.
        for dy in range(3):
            row = xp[dy:dy + H, :, :]                          # (H, W+2, Cin)
            patch = jnp.concatenate(
                [row[:, 0:W, :], row[:, 1:W + 1, :], row[:, 2:W + 2, :]],
                axis=-1).reshape(H * W, 3 * Cin)
            acc = acc + jnp.dot(patch.astype(jnp.bfloat16), w_ref[dy],
                                preferred_element_type=jnp.float32)

    y = jnp.maximum(acc, 0.0).reshape(H, W, Cout)              # fused ReLU, f32

    if not pool:
        o_ref[...] = y.astype(o_ref.dtype)
    else:
        # Fused 2x2 stride-2 maxpool epilogue (no HBM round trip).
        y_ref = scratch[1]
        Ho, Wo = H // 2, W // 2
        y_ref[...] = y
        y00 = y_ref[pl.ds(0, Ho, stride=2), pl.ds(0, Wo, stride=2), :]
        y01 = y_ref[pl.ds(0, Ho, stride=2), pl.ds(1, Wo, stride=2), :]
        y10 = y_ref[pl.ds(1, Ho, stride=2), pl.ds(0, Wo, stride=2), :]
        y11 = y_ref[pl.ds(1, Ho, stride=2), pl.ds(1, Wo, stride=2), :]
        o_ref[...] = jnp.maximum(jnp.maximum(y00, y01),
                                 jnp.maximum(y10, y11)).astype(o_ref.dtype)


def _maxpool2x2_kernel(x_ref, o_ref):
    # Standalone fallback pool (unused for i=2, j=2: the pool is fused above).
    Ho, Wo, _ = o_ref.shape
    x00 = x_ref[pl.ds(0, Ho, stride=2), pl.ds(0, Wo, stride=2), :]
    x01 = x_ref[pl.ds(0, Ho, stride=2), pl.ds(1, Wo, stride=2), :]
    x10 = x_ref[pl.ds(1, Ho, stride=2), pl.ds(0, Wo, stride=2), :]
    x11 = x_ref[pl.ds(1, Ho, stride=2), pl.ds(1, Wo, stride=2), :]
    o_ref[...] = jnp.maximum(jnp.maximum(x00, x01), jnp.maximum(x10, x11))


# ----------------------------------------------------------------------------
# pallas_call wrappers (one image per grid step)
# ----------------------------------------------------------------------------

def conv3x3_relu(x_nhwc, w, b, *, pool=False):
    """x_nhwc: (N,H,W,Cin); w: (3,3,Cin,Cout) f32; b: (Cout,) f32.

    Returns bf16 (N,Ho,Wo,Cout), Ho,Wo = H,W (pool=False) or H/2,W/2 (pool).
    """
    N, H, W, Cin = x_nhwc.shape
    Cout = w.shape[-1]
    single = (9 * Cin) <= 128        # first layer (Cin=3): one K=27 matmul
    if single:
        wf = w.reshape(9 * Cin, Cout).astype(jnp.bfloat16)
        w_spec = pl.BlockSpec((9 * Cin, Cout), lambda n: (0, 0))
    else:
        wf = w.reshape(3, 3 * Cin, Cout).astype(jnp.bfloat16)
        w_spec = pl.BlockSpec((3, 3 * Cin, Cout), lambda n: (0, 0, 0))
    bf = b.reshape(1, Cout).astype(jnp.float32)

    Ho, Wo = (H // 2, W // 2) if pool else (H, W)
    scratch = [pltpu.VMEM((H + 2, W + 2, Cin), jnp.float32)]
    if pool:
        scratch.append(pltpu.VMEM((H, W, Cout), jnp.float32))

    kernel = functools.partial(_conv3x3_relu_kernel, pool=pool,
                               single_matmul=single)
    return pl.pallas_call(
        kernel,
        out_shape=jax.ShapeDtypeStruct((N, Ho, Wo, Cout), jnp.bfloat16),
        grid=(N,),
        in_specs=[
            pl.BlockSpec((None, H, W, Cin), lambda n: (n, 0, 0, 0)),
            w_spec,
            pl.BlockSpec((1, Cout), lambda n: (0, 0)),
        ],
        out_specs=pl.BlockSpec((None, Ho, Wo, Cout), lambda n: (n, 0, 0, 0)),
        scratch_shapes=scratch,
        compiler_params=pltpu.CompilerParams(
            dimension_semantics=("parallel",),
            vmem_limit_bytes=64 * 1024 * 1024),
    )(x_nhwc.astype(jnp.bfloat16), wf, bf)


def maxpool2x2(x_nhwc):
    """Standalone 2x2/2 maxpool (fallback; the VGG pool here is fused)."""
    N, H, W, C = x_nhwc.shape
    Ho, Wo = H // 2, W // 2
    return pl.pallas_call(
        _maxpool2x2_kernel,
        out_shape=jax.ShapeDtypeStruct((N, Ho, Wo, C), x_nhwc.dtype),
        grid=(N,),
        in_specs=[pl.BlockSpec((None, H, W, C), lambda n: (n, 0, 0, 0))],
        out_specs=pl.BlockSpec((None, Ho, Wo, C), lambda n: (n, 0, 0, 0)),
        compiler_params=pltpu.CompilerParams(
            dimension_semantics=("parallel",)),
    )(x_nhwc)


# ----------------------------------------------------------------------------
# Truncated-VGG19 construction (mirrors the PyTorch truncation logic exactly)
# ----------------------------------------------------------------------------

_VGG19_CFG = [64, 64, 'M', 128, 128, 'M', 256, 256, 256, 256, 'M',
              512, 512, 512, 512, 'M', 512, 512, 512, 512, 'M']


def build_truncated_vgg19_layers(i, j):
    layers = []
    cin = 3
    for v in _VGG19_CFG:
        if v == 'M':
            layers.append(('pool',))
        else:
            layers.append(('conv', cin, v))
            layers.append(('relu',))
            cin = v
    maxpool_counter = 0
    conv_counter = 0
    truncate_at = 0
    for layer in layers:
        truncate_at += 1
        if layer[0] == 'conv':
            conv_counter += 1
        if layer[0] == 'pool':
            maxpool_counter += 1
            conv_counter = 0
        if maxpool_counter == i - 1 and conv_counter == j:
            break
    assert maxpool_counter == i - 1 and conv_counter == j, \
        'One or both of i=%d and j=%d are not valid choices for the VGG19!' % (i, j)
    return layers[:truncate_at + 1]


def init_params(layers, key):
    """Deterministic synthetic weights with the true VGG19 shapes."""
    params = []
    for layer in layers:
        if layer[0] == 'conv':
            _, cin, cout = layer
            key, wk = jax.random.split(key)
            fan_in = 9 * cin
            w = (jax.random.normal(wk, (3, 3, cin, cout), jnp.float32)
                 / (fan_in ** 0.5))
            b = jnp.full((cout,), 0.01, jnp.float32)
            params.append((w, b))
        else:
            params.append(None)
    return params


def truncated_vgg19_forward(x_nchw, layers, params):
    """Forward pass.  Input/output are NCHW f32, as in the PyTorch module."""
    x = jnp.transpose(x_nchw, (0, 2, 3, 1)).astype(jnp.bfloat16)  # NCHW->NHWC
    idx = 0
    while idx < len(layers):
        kind = layers[idx][0]
        if kind == 'conv':
            w, b = params[idx]
            assert idx + 1 < len(layers) and layers[idx + 1][0] == 'relu'
            fuse_pool = (idx + 2 < len(layers)) and layers[idx + 2][0] == 'pool'
            x = conv3x3_relu(x, w, b, pool=fuse_pool)
            idx += 3 if fuse_pool else 2
        elif kind == 'pool':
            x = maxpool2x2(x)
            idx += 1
        else:  # bare relu (cannot occur given VGG structure)
            x = jnp.maximum(x, 0.0)
            idx += 1
    return jnp.transpose(x.astype(jnp.float32), (0, 3, 1, 2))     # NHWC->NCHW


# ----------------------------------------------------------------------------
# Matched-precision pure-JAX reference (bf16 matmuls, f32 accumulation)
# ----------------------------------------------------------------------------

def reference_forward(x_nchw, layers, params):
    x = jnp.transpose(x_nchw, (0, 2, 3, 1)).astype(jnp.bfloat16)
    idx = 0
    while idx < len(layers):
        kind = layers[idx][0]
        if kind == 'conv':
            w, b = params[idx]
            y = jax.lax.conv_general_dilated(
                x.astype(jnp.bfloat16), w.astype(jnp.bfloat16),
                window_strides=(1, 1), padding='SAME',
                dimension_numbers=('NHWC', 'HWIO', 'NHWC'),
                preferred_element_type=jnp.float32)
            x = jnp.maximum(y + b.astype(jnp.float32), 0.0).astype(jnp.bfloat16)
            idx += 2
        elif kind == 'pool':
            N, H, W, C = x.shape
            x = x.reshape(N, H // 2, 2, W // 2, 2, C).max(axis=(2, 4))
            idx += 1
        else:
            x = jnp.maximum(x, 0.0)
            idx += 1
    return jnp.transpose(x.astype(jnp.float32), (0, 3, 1, 2))


# ----------------------------------------------------------------------------
# Demo
# ----------------------------------------------------------------------------

if __name__ == "__main__":
    i_idx, j_idx = 2, 2   # j-th conv (after activation) before the i-th maxpool
    layers = build_truncated_vgg19_layers(i_idx, j_idx)

    key = jax.random.PRNGKey(0)
    key, pkey, xkey = jax.random.split(key, 3)
    params = init_params(layers, pkey)

    # Small NCHW input, like the PyTorch module expects: (N, 3, H, W)
    x = jax.random.normal(xkey, (2, 3, 16, 16), jnp.float32)

    out = truncated_vgg19_forward(x, layers, params)
    out = jax.block_until_ready(out)

    assert out.shape == (2, 128, 8, 8), out.shape

    ref = reference_forward(x, layers, params)
    ref = jax.block_until_ready(ref)
    max_err = float(jnp.max(jnp.abs(out - ref)))
    assert jnp.allclose(out, ref, rtol=2e-2, atol=2e-2), max_err

    print("KERNEL_OK")
</pallas_src>

<mosaic_0001>
module attributes {stable_mosaic.version = 11 : i64} {
  func.func @_conv3x3_relu_kernel(%arg0: i32, %arg1: memref<1x16x16x3xbf16, #tpu.memory_space<vmem>>, %arg2: memref<27x64xbf16, #tpu.memory_space<vmem>>, %arg3: memref<1x64xf32, #tpu.memory_space<vmem>>, %arg4: memref<1x16x16x64xbf16, #tpu.memory_space<vmem>>, %arg5: memref<18x18x3xf32, #tpu.memory_space<vmem>>) attributes {dimension_semantics = [#tpu.dimension_semantics<parallel>], iteration_bounds = array<i64: 2>, scalar_prefetch = 0 : i64, scratch_operands = 1 : i64, tpu.core_type = #tpu.core_type<tc>, window_params = [{transform_indices = @transform_0, window_bounds = array<i64: 1, 16, 16, 3>}, {pipeline_mode = #tpu.pipeline_mode<synchronous>, transform_indices = @transform_1, window_bounds = array<i64: 27, 64>}, {pipeline_mode = #tpu.pipeline_mode<synchronous>, transform_indices = @transform_2, window_bounds = array<i64: 1, 64>}, {transform_indices = @transform_3, window_bounds = array<i64: 1, 16, 16, 64>}]} {
    %cst = arith.constant 0.000000e+00 : f32
    %0 = vector.broadcast %cst : f32 to vector<18x18x3xf32>
    %c0 = arith.constant 0 : index
    %c0_0 = arith.constant 0 : index
    %c0_1 = arith.constant 0 : index
    %1 = vector.load %arg5[%c0, %c0_0, %c0_1] : memref<18x18x3xf32, #tpu.memory_space<vmem>>, vector<18x18x3xf32>
    tpu.vector_store %arg5[%c0, %c0_0, %c0_1], %0 {strides = array<i32>} : memref<18x18x3xf32, #tpu.memory_space<vmem>>, vector<18x18x3xf32>,
    %c0_2 = arith.constant 0 : index
    %c0_3 = arith.constant 0 : index
    %c0_4 = arith.constant 0 : index
    %c0_5 = arith.constant 0 : index
    %2 = vector.load %arg1[%c0_2, %c0_3, %c0_4, %c0_5] : memref<1x16x16x3xbf16, #tpu.memory_space<vmem>>, vector<1x16x16x3xbf16>
    %3 = vector.shape_cast %2 : vector<1x16x16x3xbf16> to vector<16x16x3xbf16>
    %4 = arith.extf %3 : vector<16x16x3xbf16> to vector<16x16x3xf32>
    %c1 = arith.constant 1 : index
    %c1_6 = arith.constant 1 : index
    %c0_7 = arith.constant 0 : index
    %5 = vector.load %arg5[%c1, %c1_6, %c0_7] : memref<18x18x3xf32, #tpu.memory_space<vmem>>, vector<16x16x3xf32>
    tpu.vector_store %arg5[%c1, %c1_6, %c0_7], %4 {strides = array<i32>} : memref<18x18x3xf32, #tpu.memory_space<vmem>>, vector<16x16x3xf32>,
    %c0_8 = arith.constant 0 : index
    %c0_9 = arith.constant 0 : index
    %c0_10 = arith.constant 0 : index
    %6 = vector.load %arg5[%c0_8, %c0_9, %c0_10] : memref<18x18x3xf32, #tpu.memory_space<vmem>>, vector<18x18x3xf32>
    %c0_11 = arith.constant 0 : index
    %c0_12 = arith.constant 0 : index
    %7 = vector.load %arg3[%c0_11, %c0_12] : memref<1x64xf32, #tpu.memory_space<vmem>>, vector<1x64xf32>
    %8 = vector.shape_cast %7 : vector<1x64xf32> to vector<1x64xf32>
    %9 = vector.broadcast %8 : vector<1x64xf32> to vector<256x64xf32>
    %10 = vector.extract_strided_slice %6 {offsets = [0, 0, 0], sizes = [16, 16, 3], strides = [1, 1, 1]} : vector<18x18x3xf32> to vector<16x16x3xf32>
    %11 = vector.extract_strided_slice %6 {offsets = [0, 1, 0], sizes = [16, 16, 3], strides = [1, 1, 1]} : vector<18x18x3xf32> to vector<16x16x3xf32>
    %12 = vector.extract_strided_slice %6 {offsets = [0, 2, 0], sizes = [16, 16, 3], strides = [1, 1, 1]} : vector<18x18x3xf32> to vector<16x16x3xf32>
    %13 = vector.extract_strided_slice %6 {offsets = [1, 0, 0], sizes = [16, 16, 3], strides = [1, 1, 1]} : vector<18x18x3xf32> to vector<16x16x3xf32>
    %14 = vector.extract_strided_slice %6 {offsets = [1, 1, 0], sizes = [16, 16, 3], strides = [1, 1, 1]} : vector<18x18x3xf32> to vector<16x16x3xf32>
    %15 = vector.extract_strided_slice %6 {offsets = [1, 2, 0], sizes = [16, 16, 3], strides = [1, 1, 1]} : vector<18x18x3xf32> to vector<16x16x3xf32>
    %16 = vector.extract_strided_slice %6 {offsets = [2, 0, 0], sizes = [16, 16, 3], strides = [1, 1, 1]} : vector<18x18x3xf32> to vector<16x16x3xf32>
    %17 = vector.extract_strided_slice %6 {offsets = [2, 1, 0], sizes = [16, 16, 3], strides = [1, 1, 1]} : vector<18x18x3xf32> to vector<16x16x3xf32>
    %18 = vector.extract_strided_slice %6 {offsets = [2, 2, 0], sizes = [16, 16, 3], strides = [1, 1, 1]} : vector<18x18x3xf32> to vector<16x16x3xf32>
    %19 = tpu.concatenate %10, %11, %12, %13, %14, %15, %16, %17, %18 in 2 : vector<16x16x3xf32>, vector<16x16x3xf32>, vector<16x16x3xf32>, vector<16x16x3xf32>, vector<16x16x3xf32>, vector<16x16x3xf32>, vector<16x16x3xf32>, vector<16x16x3xf32>, vector<16x16x3xf32> -> vector<16x16x27xf32>
    %20 = vector.shape_cast %19 : vector<16x16x27xf32> to vector<256x27xf32>
    %21 = arith.truncf %20 : vector<256x27xf32> to vector<256x27xbf16>
    %c0_13 = arith.constant 0 : index
    %c0_14 = arith.constant 0 : index
    %22 = vector.load %arg2[%c0_13, %c0_14] : memref<27x64xbf16, #tpu.memory_space<vmem>>, vector<27x64xbf16>
    %cst_15 = arith.constant dense<0.000000e+00> : vector<256x64xf32>
    %23 = tpu.matmul %21, %22, %cst_15 {dimension_numbers = #tpu.dot_dimension_numbers<[1], [0], [0], [1], [0, 0, 1, 1], [], []>} : vector<256x27xbf16>, vector<27x64xbf16>, vector<256x64xf32> -> vector<256x64xf32>
    %24 = arith.addf %9, %23 : vector<256x64xf32>
    %cst_16 = arith.constant 0.000000e+00 : f32
    %25 = vector.broadcast %cst_16 : f32 to vector<256x64xf32>
    %26 = arith.maximumf %24, %25 : vector<256x64xf32>
    %27 = vector.shape_cast %26 : vector<256x64xf32> to vector<16x16x64xf32>
    %28 = arith.truncf %27 : vector<16x16x64xf32> to vector<16x16x64xbf16>
    %c0_17 = arith.constant 0 : index
    %c0_18 = arith.constant 0 : index
    %c0_19 = arith.constant 0 : index
    %c0_20 = arith.constant 0 : index
    %29 = vector.load %arg4[%c0_17, %c0_18, %c0_19, %c0_20] : memref<1x16x16x64xbf16, #tpu.memory_space<vmem>>, vector<1x16x16x64xbf16>
    %30 = vector.shape_cast %29 : vector<1x16x16x64xbf16> to vector<16x16x64xbf16>
    %31 = vector.shape_cast %28 : vector<16x16x64xbf16> to vector<1x16x16x64xbf16>
    tpu.vector_store %arg4[%c0_17, %c0_18, %c0_19, %c0_20], %31 {strides = array<i32>} : memref<1x16x16x64xbf16, #tpu.memory_space<vmem>>, vector<1x16x16x64xbf16>,
    return
  }
  func.func @transform_0(%arg0: i32) -> (i32, i32, i32, i32) {
    %c0_i32 = arith.constant 0 : i32
    %c0_i32_0 = arith.constant 0 : i32
    %c0_i32_1 = arith.constant 0 : i32
    %c0_i32_2 = arith.constant 0 : i32
    return %arg0, %c0_i32, %c0_i32_0, %c0_i32_1 : i32, i32, i32, i32
  }
  func.func @transform_1(%arg0: i32) -> (i32, i32) {
    %c0_i32 = arith.constant 0 : i32
    %c0_i32_0 = arith.constant 0 : i32
    %c0_i32_1 = arith.constant 0 : i32
    return %c0_i32, %c0_i32_0 : i32, i32
  }
  func.func @transform_2(%arg0: i32) -> (i32, i32) {
    %c0_i32 = arith.constant 0 : i32
    %c0_i32_0 = arith.constant 0 : i32
    %c0_i32_1 = arith.constant 0 : i32
    return %c0_i32, %c0_i32_0 : i32, i32
  }
  func.func @transform_3(%arg0: i32) -> (i32, i32, i32, i32) {
    %c0_i32 = arith.constant 0 : i32
    %c0_i32_0 = arith.constant 0 : i32
    %c0_i32_1 = arith.constant 0 : i32
    %c0_i32_2 = arith.constant 0 : i32
    return %arg0, %c0_i32, %c0_i32_0, %c0_i32_1 : i32, i32, i32, i32
  }
}

</mosaic_0001>

<llo_original>
// kernel: tpu_custom_call.1
$region0: #{tpu_custom_call.1}
  #allocation0 [shape = 'u32[]', space=smem, size = 0x4, offset = 0x4, fixed_abs, tag = 'smem constant byte address 0x4 - core index']
  #allocation1 [shape = 'u32[144,128]{1,0:T(1,128)}', space=vmem, size = 0x12000, scoped, tag = 'internal scratch']
  #allocation2 [shape = 'f32[18,18,3]{2,1,0:T(8,128)}', space=vmem, size = 0x36000, scoped, tag = 'scratch operand']
  %s0 = inlined_call_operand.vmem [shape: bf16[2,16,16,3], index: 0, kind: input, shape index: {}]
  %s1 = inlined_call_operand.vmem [shape: bf16[27,64], index: 1, kind: input, shape index: {}]
  %s2 = inlined_call_operand.vmem [shape: f32[1,64], index: 2, kind: input, shape index: {}]
  %s3 = inlined_call_operand.hbm [shape: bf16[2,16,16,64], index: 3, kind: output, shape index: {}]
  %s4 = sld [smem:[#allocation0]]
  $region45: #{tpu_custom_call.1} parent=0
    _
  %s6 = ssub.s32 1, %s4
  %s7 = scalar_select 0, %s6, %s4
  $region1: #{tpu_custom_call.1} parent=0
    #allocation3 [shape = 'u8[131072]{0}', space=vmem, size = 0x20000, scoped, tag = 'output window, operand 0']
    #allocation4 [shape = 's32[2]{0}', space=sflag, size = 0x8, scoped, tag = 'scoped memory for tpu_custom_call.1']
    %8 = vsyncpa [#allocation4], 0
    %s9 = scalar_lea.sflag [#allocation4], 1
    %10 = vsyncpa %s9, 0
    loop: start=0, step=1, limit=4
    $region2: #{tpu_custom_call.1} parent=1 // loop_pre_header
      _
    $region3: #{tpu_custom_call.1} parent=1 // loop_header
      %s12 = sphi 0, %s16
      %p13 = scmp.ge.s32.totalorder %s12, 4
      %s22 = sphi 0, %s24
      %s25 = sphi 0, %s22
      %s26 = sphi 0, %s25
      %s42 = sphi 0, %s26
      %s46 = sphi 0, %s46
      %s48 = sphi 0, %s46
      %s49 = sphi 0, %s48
      %s63 = sphi 0, %s49
      %s67 = sphi 0, %s67
      %s69 = sphi 0, %s67
      %s70 = sphi 0, %s69
      %s84 = sphi 0, %s70
      %s90 = sphi 0, %s92
      %s93 = sphi 0, %s90
      %s94 = sphi 0, %s93
      %s110 = sphi 0, %s94
    $region4: #{tpu_custom_call.1} parent=1 // loop_header_branch
      %15 = sbr.rel (%p13) target = $region8
    $region5: #{tpu_custom_call.1} parent=1 // loop_body
      %s17 = ssub.s32 %s12, 1
      %s18 = ssub.s32 %s12, 2
      %s19 = sadd.s32 %s12, 1
      %s20 = ssub.s32 %s12, %s19
      %p21 = scmp.eq.s32.totalorder %s20, 0
      %s23 = sadd.s32 %s22, 1
      %s24 = scalar_select %p21, %s22, %s23
      %p27 = pneg %p21
      %p28 = scmp.eq.s32.totalorder %s12, 1
      %p29 = por %p27, %p28
      %p30 = scmp.ne.s32.totalorder %s22, %s25
      %p31 = scmp.eq.s32.totalorder %s12, 0
      %p32 = por %p30, %p31
      %p33 = scmp.ne.s32.totalorder %s22, %s25
      %p34 = scmp.eq.s32.totalorder %s17, 1
      %p35 = por %p33, %p34
      %p36 = scmp.ne.s32.totalorder %s25, %s26
      %p37 = scmp.eq.s32.totalorder %s17, 0
      %p38 = por %p36, %p37
      %p39 = scmp.ne.s32.totalorder %s25, %s26
      %p40 = scmp.eq.s32.totalorder %s18, 1
      %p41 = por %p39, %p40
      %p43 = scmp.ne.s32.totalorder %s26, %s42
      %p44 = scmp.eq.s32.totalorder %s18, 0
      %p45 = por %p43, %p44
      %s47 = sadd.s32 %s46, 1
      %p50 = scmp.eq.s32.totalorder %s12, 1
      %p51 = scmp.ne.s32.totalorder %s46, %s48
      %p52 = scmp.eq.s32.totalorder %s12, 0
      %p53 = por %p51, %p52
      %p54 = scmp.ne.s32.totalorder %s46, %s48
      %p55 = scmp.eq.s32.totalorder %s17, 1
      %p56 = por %p54, %p55
      %p57 = scmp.ne.s32.totalorder %s48, %s49
      %p58 = scmp.eq.s32.totalorder %s17, 0
      %p59 = por %p57, %p58
      %p60 = scmp.ne.s32.totalorder %s48, %s49
      %p61 = scmp.eq.s32.totalorder %s18, 1
      %p62 = por %p60, %p61
      %p64 = scmp.ne.s32.totalorder %s49, %s63
      %p65 = scmp.eq.s32.totalorder %s18, 0
      %p66 = por %p64, %p65
      %s68 = sadd.s32 %s67, 1
      %p71 = scmp.eq.s32.totalorder %s12, 1
      %p72 = scmp.ne.s32.totalorder %s67, %s69
      %p73 = scmp.eq.s32.totalorder %s12, 0
      %p74 = por %p72, %p73
      %p75 = scmp.ne.s32.totalorder %s67, %s69
      %p76 = scmp.eq.s32.totalorder %s17, 1
      %p77 = por %p75, %p76
      %p78 = scmp.ne.s32.totalorder %s69, %s70
      %p79 = scmp.eq.s32.totalorder %s17, 0
      %p80 = por %p78, %p79
      %p81 = scmp.ne.s32.totalorder %s69, %s70
      %p82 = scmp.eq.s32.totalorder %s18, 1
      %p83 = por %p81, %p82
      %p85 = scmp.ne.s32.totalorder %s70, %s84
      %p86 = scmp.eq.s32.totalorder %s18, 0
      %p87 = por %p85, %p86
      %s88 = ssub.s32 %s12, %s19
      %p89 = scmp.eq.s32.totalorder %s88, 0
      %s91 = sadd.s32 %s90, 1
      %s92 = scalar_select %p89, %s90, %s91
      %p95 = pneg %p89
      %p96 = scmp.eq.s32.totalorder %s12, 1
      %p97 = por %p95, %p96
      %p98 = scmp.ne.s32.totalorder %s90, %s93
      %p99 = scmp.eq.s32.totalorder %s12, 0
      %p100 = por %p98, %p99
      %p101 = scmp.ne.s32.totalorder %s90, %s93
      %p102 = scmp.eq.s32.totalorder %s17, 1
      %p103 = por %p101, %p102
      %p104 = scmp.ne.s32.totalorder %s93, %s94
      %p105 = scmp.eq.s32.totalorder %s17, 0
      %p106 = por %p104, %p105
      %p107 = scmp.ne.s32.totalorder %s93, %s94
      %p108 = scmp.eq.s32.totalorder %s18, 1
      %p109 = por %p107, %p108
      %p111 = scmp.ne.s32.totalorder %s94, %s110
      %p112 = scmp.eq.s32.totalorder %s18, 0
      %p113 = por %p111, %p112
      %p114 = scmp.le.s32.totalorder 1, %s12
      %p115 = scmp.lt.s32.totalorder %s12, 3
      %p116 = pnand %p114, %p115
      %p117 = pneg %p116
      // Predicated region
      $region9: #{tpu_custom_call.1} parent=5 // pred_check
        _
      $region10: #{tpu_custom_call.1} parent=5 // pred_check_branch
        %119 = sbr.rel (%p116) target = $region12
      $region11: #{tpu_custom_call.1} parent=5 // pred_region
        %s120 = ssub.s32 %s12, 1
        // Predicated region
        $region13: #{tpu_custom_call.1} parent=11 // pred_check
          %p121 = pneg %p59
        $region14: #{tpu_custom_call.1} parent=11 // pred_check_branch
          %123 = sbr.rel (%p121) target = $region16
        $region15: #{tpu_custom_call.1} parent=11 // pred_region
          _
        $region16: #{tpu_custom_call.1} parent=11 // pred_fallthru
          _
        // Predicated region
        $region17: #{tpu_custom_call.1} parent=11 // pred_check
          %p124 = pneg %p80
        $region18: #{tpu_custom_call.1} parent=11 // pred_check_branch
          %126 = sbr.rel (%p124) target = $region20
        $region19: #{tpu_custom_call.1} parent=11 // pred_region
          _
        $region20: #{tpu_custom_call.1} parent=11 // pred_fallthru
          _
      $region12: #{tpu_custom_call.1} parent=5 // pred_fallthru
        _
      %p127 = scmp.lt.s32.totalorder %s12, 2
      // Predicated region
      $region21: #{tpu_custom_call.1} parent=5 // pred_check
        %p128 = pneg %p127
      $region22: #{tpu_custom_call.1} parent=5 // pred_check_branch
        %130 = sbr.rel (%p128) target = $region24
      $region23: #{tpu_custom_call.1} parent=5 // pred_region
        // Predicated region
        $region25: #{tpu_custom_call.1} parent=23 // pred_check
          %p131 = pneg %p32
        $region26: #{tpu_custom_call.1} parent=23 // pred_check_branch
          %133 = sbr.rel (%p131) target = $region28
        $region27: #{tpu_custom_call.1} parent=23 // pred_region
          %p134 = scmp.lt.s32.totalorder %s12, 1
          %s135 = scalar_select %p134, %s12, 1
          %s136 = smul.addr %s135, 32
          %s137 = smul.addr %s136, 4
          %s138 = scalar_lea.vmem %s0, %s137
        $region28: #{tpu_custom_call.1} parent=23 // pred_fallthru
          _
      $region24: #{tpu_custom_call.1} parent=5 // pred_fallthru
        _
      %p139 = scmp.le.s32.totalorder 1, %s12
      %p140 = scmp.lt.s32.totalorder %s12, 3
      %p141 = pnand %p139, %p140
      %p142 = pneg %p141
      // Predicated region
      $region29: #{tpu_custom_call.1} parent=5 // pred_check
        _
      $region30: #{tpu_custom_call.1} parent=5 // pred_check_branch
        %144 = sbr.rel (%p141) target = $region32
      $region31: #{tpu_custom_call.1} parent=5 // pred_region
        %s145 = ssub.s32 %s12, 1
        %p146 = scmp.lt.s32.totalorder %s17, 1
        %s147 = scalar_select %p146, %s17, 1
        %s148 = smul.addr %s147, 32
        %s149 = smul.addr %s148, 4
        %s150 = scalar_lea.vmem %s0, %s149
        %p151 = pneg %p38
        %p152 = pneg %p35
        %p153 = pneg %p59
        %p154 = pneg %p56
        %p155 = pneg %p80
        %p156 = pneg %p77
        %p157 = pneg %p106
        %p158 = pneg %p103
        %s159 = sand.u32 %s93, 1
        %s160 = scalar_lea.sflag [#allocation4], %s159
        %s161 = sand.u32 %s93, 1
        %s162 = smul.addr %s161, 128
        %s163 = scalar_lea.vmem [#allocation3], %s162
        %p164 = scmp.lt.s32.totalorder %s17, 1
        %s165 = scalar_select %p164, %s17, 1
        %s166 = smul.addr %s165, 32
        %s167 = smul.addr %s166, 4
        %s168 = scalar_lea.vmem %s0, %s167
        %vm170 = vcmask 23552
        %171 = vst.msk [vmem:[#allocation2] sm:$0xff] %vm170, 0.0
        %172 = vst.msk [vmem:[#allocation2 + $0x8] sm:$0xff] %vm170, 0.0
        %vm173 = vcmask 17408
        %174 = vst.msk [vmem:[#allocation2 + $0x10] sm:$0x3] %vm173, 0.0
        %175 = vst.msk [vmem:[#allocation2 + $0x18] sm:$0xff] %vm170, 0.0
        %176 = vst.msk [vmem:[#allocation2 + $0x20] sm:$0xff] %vm170, 0.0
        %177 = vst.msk [vmem:[#allocation2 + $0x28] sm:$0x3] %vm173, 0.0
        %178 = vst.msk [vmem:[#allocation2 + $0x30] sm:$0xff] %vm170, 0.0
        %179 = vst.msk [vmem:[#allocation2 + $0x38] sm:$0xff] %vm170, 0.0
        %180 = vst.msk [vmem:[#allocation2 + $0x40] sm:$0x3] %vm173, 0.0
        %181 = vst.msk [vmem:[#allocation2 + $0x48] sm:$0xff] %vm170, 0.0
        %182 = vst.msk [vmem:[#allocation2 + $0x50] sm:$0xff] %vm170, 0.0
        %183 = vst.msk [vmem:[#allocation2 + $0x58] sm:$0x3] %vm173, 0.0
        %184 = vst.msk [vmem:[#allocation2 + $0x60] sm:$0xff] %vm170, 0.0
        %185 = vst.msk [vmem:[#allocation2 + $0x68] sm:$0xff] %vm170, 0.0
        %186 = vst.msk [vmem:[#allocation2 + $0x70] sm:$0x3] %vm173, 0.0
        %187 = vst.msk [vmem:[#allocation2 + $0x78] sm:$0xff] %vm170, 0.0
        %188 = vst.msk [vmem:[#allocation2 + $0x80] sm:$0xff] %vm170, 0.0
        %189 = vst.msk [vmem:[#allocation2 + $0x88] sm:$0x3] %vm173, 0.0
        %190 = vst.msk [vmem:[#allocation2 + $0x90] sm:$0xff] %vm170, 0.0
        %191 = vst.msk [vmem:[#allocation2 + $0x98] sm:$0xff] %vm170, 0.0
        %192 = vst.msk [vmem:[#allocation2 + $0xa0] sm:$0x3] %vm173, 0.0
        %193 = vst.msk [vmem:[#allocation2 + $0xa8] sm:$0xff] %vm170, 0.0
        %194 = vst.msk [vmem:[#allocation2 + $0xb0] sm:$0xff] %vm170, 0.0
        %195 = vst.msk [vmem:[#allocation2 + $0xb8] sm:$0x3] %vm173, 0.0
        %196 = vst.msk [vmem:[#allocation2 + $0xc0] sm:$0xff] %vm170, 0.0
        %197 = vst.msk [vmem:[#allocation2 + $0xc8] sm:$0xff] %vm170, 0.0
        %198 = vst.msk [vmem:[#allocation2 + $0xd0] sm:$0x3] %vm173, 0.0
        %199 = vst.msk [vmem:[#allocation2 + $0xd8] sm:$0xff] %vm170, 0.0
        %200 = vst.msk [vmem:[#allocation2 + $0xe0] sm:$0xff] %vm170, 0.0
        %201 = vst.msk [vmem:[#allocation2 + $0xe8] sm:$0x3] %vm173, 0.0
        %202 = vst.msk [vmem:[#allocation2 + $0xf0] sm:$0xff] %vm170, 0.0
        %203 = vst.msk [vmem:[#allocation2 + $0xf8] sm:$0xff] %vm170, 0.0
        %204 = vst.msk [vmem:[#allocation2 + $0x100] sm:$0x3] %vm173, 0.0
        %205 = vst.msk [vmem:[#allocation2 + $0x108] sm:$0xff] %vm170, 0.0
        %206 = vst.msk [vmem:[#allocation2 + $0x110] sm:$0xff] %vm170, 0.0
        %207 = vst.msk [vmem:[#allocation2 + $0x118] sm:$0x3] %vm173, 0.0
        %208 = vst.msk [vmem:[#allocation2 + $0x120] sm:$0xff] %vm170, 0.0
        %209 = vst.msk [vmem:[#allocation2 + $0x128] sm:$0xff] %vm170, 0.0
        %210 = vst.msk [vmem:[#allocation2 + $0x130] sm:$0x3] %vm173, 0.0
        %211 = vst.msk [vmem:[#allocation2 + $0x138] sm:$0xff] %vm170, 0.0
        %212 = vst.msk [vmem:[#allocation2 + $0x140] sm:$0xff] %vm170, 0.0
        %213 = vst.msk [vmem:[#allocation2 + $0x148] sm:$0x3] %vm173, 0.0
        %214 = vst.msk [vmem:[#allocation2 + $0x150] sm:$0xff] %vm170, 0.0
        %215 = vst.msk [vmem:[#allocation2 + $0x158] sm:$0xff] %vm170, 0.0
        %216 = vst.msk [vmem:[#allocation2 + $0x160] sm:$0x3] %vm173, 0.0
        %217 = vst.msk [vmem:[#allocation2 + $0x168] sm:$0xff] %vm170, 0.0
        %218 = vst.msk [vmem:[#allocation2 + $0x170] sm:$0xff] %vm170, 0.0
        %219 = vst.msk [vmem:[#allocation2 + $0x178] sm:$0x3] %vm173, 0.0
        %220 = vst.msk [vmem:[#allocation2 + $0x180] sm:$0xff] %vm170, 0.0
        %221 = vst.msk [vmem:[#allocation2 + $0x188] sm:$0xff] %vm170, 0.0
        %222 = vst.msk [vmem:[#allocation2 + $0x190] sm:$0x3] %vm173, 0.0
        %223 = vst.msk [vmem:[#allocation2 + $0x198] sm:$0xff] %vm170, 0.0
        %224 = vst.msk [vmem:[#allocation2 + $0x1a0] sm:$0xff] %vm170, 0.0
        %225 = vst.msk [vmem:[#allocation2 + $0x1a8] sm:$0x3] %vm173, 0.0
        %v226 = vld [vmem:[%s168] sm:$0xf]
        %v227 = vld [vmem:[%s168 + $0x4] sm:$0xf]
        %v228 = vld [vmem:[%s168 + $0x8] sm:$0xf]
        %v229 = vld [vmem:[%s168 + $0xc] sm:$0xf]
        %v230 = vld [vmem:[%s168 + $0x10] sm:$0xf]
        %v231 = vld [vmem:[%s168 + $0x14] sm:$0xf]
        %v232 = vld [vmem:[%s168 + $0x18] sm:$0xf]
        %v233 = vld [vmem:[%s168 + $0x1c] sm:$0xf]
        %v234 = vld [vmem:[%s168 + $0x20] sm:$0xf]
        %v235 = vld [vmem:[%s168 + $0x24] sm:$0xf]
        %v236 = vld [vmem:[%s168 + $0x28] sm:$0xf]
        %v237 = vld [vmem:[%s168 + $0x2c] sm:$0xf]
        %v238 = vld [vmem:[%s168 + $0x30] sm:$0xf]
        %v239 = vld [vmem:[%s168 + $0x34] sm:$0xf]
        %v240 = vld [vmem:[%s168 + $0x38] sm:$0xf]
        %v241 = vld [vmem:[%s168 + $0x3c] sm:$0xf]
        %v242 = vld [vmem:[%s168 + $0x40] sm:$0xf]
        %v243 = vld [vmem:[%s168 + $0x44] sm:$0xf]
        %v244 = vld [vmem:[%s168 + $0x48] sm:$0xf]
        %v245 = vld [vmem:[%s168 + $0x4c] sm:$0xf]
        %v246 = vld [vmem:[%s168 + $0x50] sm:$0xf]
        %v247 = vld [vmem:[%s168 + $0x54] sm:$0xf]
        %v248 = vld [vmem:[%s168 + $0x58] sm:$0xf]
        %v249 = vld [vmem:[%s168 + $0x5c] sm:$0xf]
        %v250 = vld [vmem:[%s168 + $0x60] sm:$0xf]
        %v251 = vld [vmem:[%s168 + $0x64] sm:$0xf]
        %v252 = vld [vmem:[%s168 + $0x68] sm:$0xf]
        %v253 = vld [vmem:[%s168 + $0x6c] sm:$0xf]
        %v254 = vld [vmem:[%s168 + $0x70] sm:$0xf]
        %v255 = vld [vmem:[%s168 + $0x74] sm:$0xf]
        %v256 = vld [vmem:[%s168 + $0x78] sm:$0xf]
        %v257 = vld [vmem:[%s168 + $0x7c] sm:$0xf]
        %v258 = vunpack.c.l.bf16 %v226
        %v259 = vunpack.c.l.bf16 %v227
        %v260 = vunpack.c.l.bf16 %v228
        %v261 = vunpack.c.l.bf16 %v229
        %v262 = vunpack.c.l.bf16 %v230
        %v263 = vunpack.c.l.bf16 %v231
        %v264 = vunpack.c.l.bf16 %v232
        %v265 = vunpack.c.l.bf16 %v233
        %v266 = vunpack.c.l.bf16 %v234
        %v267 = vunpack.c.l.bf16 %v235
        %v268 = vunpack.c.l.bf16 %v236
        %v269 = vunpack.c.l.bf16 %v237
        %v270 = vunpack.c.l.bf16 %v238
        %v271 = vunpack.c.l.bf16 %v239
        %v272 = vunpack.c.l.bf16 %v240
        %v273 = vunpack.c.l.bf16 %v241
        %v274 = vunpack.c.l.bf16 %v242
        %v275 = vunpack.c.l.bf16 %v243
        %v276 = vunpack.c.l.bf16 %v244
        %v277 = vunpack.c.l.bf16 %v245
        %v278 = vunpack.c.l.bf16 %v246
        %v279 = vunpack.c.l.bf16 %v247
        %v280 = vunpack.c.l.bf16 %v248
        %v281 = vunpack.c.l.bf16 %v249
        %v282 = vunpack.c.l.bf16 %v250
        %v283 = vunpack.c.l.bf16 %v251
        %v284 = vunpack.c.l.bf16 %v252
        %v285 = vunpack.c.l.bf16 %v253
        %v286 = vunpack.c.l.bf16 %v254
        %v287 = vunpack.c.l.bf16 %v255
        %v288 = vunpack.c.l.bf16 %v256
        %v289 = vunpack.c.l.bf16 %v257
        %s290 = scalar_lea.vmem [#allocation2], 24
        %291 = vst.msk [vmem:[%s290 + $0x1] sm:$0xff] %vm170, %v258
        %292 = vst.msk [vmem:[%s290 + $0x9] sm:$0xff] %vm170, %v259
        %293 = vst.msk [vmem:[%s290 + $0x19] sm:$0xff] %vm170, %v260
        %294 = vst.msk [vmem:[%s290 + $0x21] sm:$0xff] %vm170, %v261
        %295 = vst.msk [vmem:[%s290 + $0x31] sm:$0xff] %vm170, %v262
        %296 = vst.msk [vmem:[%s290 + $0x39] sm:$0xff] %vm170, %v263
        %297 = vst.msk [vmem:[%s290 + $0x49] sm:$0xff] %vm170, %v264
        %298 = vst.msk [vmem:[%s290 + $0x51] sm:$0xff] %vm170, %v265
        %299 = vst.msk [vmem:[%s290 + $0x61] sm:$0xff] %vm170, %v266
        %300 = vst.msk [vmem:[%s290 + $0x69] sm:$0xff] %vm170, %v267
        %301 = vst.msk [vmem:[%s290 + $0x79] sm:$0xff] %vm170, %v268
        %302 = vst.msk [vmem:[%s290 + $0x81] sm:$0xff] %vm170, %v269
        %303 = vst.msk [vmem:[%s290 + $0x91] sm:$0xff] %vm170, %v270
        %304 = vst.msk [vmem:[%s290 + $0x99] sm:$0xff] %vm170, %v271
        %305 = vst.msk [vmem:[%s290 + $0xa9] sm:$0xff] %vm170, %v272
        %306 = vst.msk [vmem:[%s290 + $0xb1] sm:$0xff] %vm170, %v273
        %307 = vst.msk [vmem:[%s290 + $0xc1] sm:$0xff] %vm170, %v274
        %308 = vst.msk [vmem:[%s290 + $0xc9] sm:$0xff] %vm170, %v275
        %309 = vst.msk [vmem:[%s290 + $0xd9] sm:$0xff] %vm170, %v276
        %310 = vst.msk [vmem:[%s290 + $0xe1] sm:$0xff] %vm170, %v277
        %311 = vst.msk [vmem:[%s290 + $0xf1] sm:$0xff] %vm170, %v278
        %312 = vst.msk [vmem:[%s290 + $0xf9] sm:$0xff] %vm170, %v279
        %313 = vst.msk [vmem:[%s290 + $0x109] sm:$0xff] %vm170, %v280
        %314 = vst.msk [vmem:[%s290 + $0x111] sm:$0xff] %vm170, %v281
        %315 = vst.msk [vmem:[%s290 + $0x121] sm:$0xff] %vm170, %v282
        %316 = vst.msk [vmem:[%s290 + $0x129] sm:$0xff] %vm170, %v283
        %317 = vst.msk [vmem:[%s290 + $0x139] sm:$0xff] %vm170, %v284
        %318 = vst.msk [vmem:[%s290 + $0x141] sm:$0xff] %vm170, %v285
        %319 = vst.msk [vmem:[%s290 + $0x151] sm:$0xff] %vm170, %v286
        %320 = vst.msk [vmem:[%s290 + $0x159] sm:$0xff] %vm170, %v287
        %321 = vst.msk [vmem:[%s290 + $0x169] sm:$0xff] %vm170, %v288
        %322 = vst.msk [vmem:[%s290 + $0x171] sm:$0xff] %vm170, %v289
        %v323 = vld [vmem:[#allocation2] sm:$0xff]
        %v324 = vld [vmem:[#allocation2 + $0x8] sm:$0xff]
        %v325 = vld [vmem:[#allocation2 + $0x10] sm:$0x3]
        %v326 = vld [vmem:[#allocation2 + $0x18] sm:$0xff]
        %v327 = vld [vmem:[#allocation2 + $0x20] sm:$0xff]
        %v328 = vld [vmem:[#allocation2 + $0x28] sm:$0x3]
        %v329 = vld [vmem:[#allocation2 + $0x30] sm:$0xff]
        %v330 = vld [vmem:[#allocation2 + $0x38] sm:$0xff]
        %v331 = vld [vmem:[#allocation2 + $0x40] sm:$0x3]
        %v332 = vld [vmem:[#allocation2 + $0x48] sm:$0xff]
        %v333 = vld [vmem:[#allocation2 + $0x50] sm:$0xff]
        %v334 = vld [vmem:[#allocation2 + $0x58] sm:$0x3]
        %v335 = vld [vmem:[#allocation2 + $0x60] sm:$0xff]
        %v336 = vld [vmem:[#allocation2 + $0x68] sm:$0xff]
        %v337 = vld [vmem:[#allocation2 + $0x70] sm:$0x3]
        %v338 = vld [vmem:[#allocation2 + $0x78] sm:$0xff]
        %v339 = vld [vmem:[#allocation2 + $0x80] sm:$0xff]
        %v340 = vld [vmem:[#allocation2 + $0x88] sm:$0x3]
        %v341 = vld [vmem:[#allocation2 + $0x90] sm:$0xff]
        %v342 = vld [vmem:[#allocation2 + $0x98] sm:$0xff]
        %v343 = vld [vmem:[#allocation2 + $0xa0] sm:$0x3]
        %v344 = vld [vmem:[#allocation2 + $0xa8] sm:$0xff]
        %v345 = vld [vmem:[#allocation2 + $0xb0] sm:$0xff]
        %v346 = vld [vmem:[#allocation2 + $0xb8] sm:$0x3]
        %v347 = vld [vmem:[#allocation2 + $0xc0] sm:$0xff]
        %v348 = vld [vmem:[#allocation2 + $0xc8] sm:$0xff]
        %v349 = vld [vmem:[#allocation2 + $0xd0] sm:$0x3]
        %v350 = vld [vmem:[#allocation2 + $0xd8] sm:$0xff]
        %v351 = vld [vmem:[#allocation2 + $0xe0] sm:$0xff]
        %v352 = vld [vmem:[#allocation2 + $0xe8] sm:$0x3]
        %v353 = vld [vmem:[#allocation2 + $0xf0] sm:$0xff]
        %v354 = vld [vmem:[#allocation2 + $0xf8] sm:$0xff]
        %v355 = vld [vmem:[#allocation2 + $0x100] sm:$0x3]
        %v356 = vld [vmem:[#allocation2 + $0x108] sm:$0xff]
        %v357 = vld [vmem:[#allocation2 + $0x110] sm:$0xff]
        %v358 = vld [vmem:[#allocation2 + $0x118] sm:$0x3]
        %v359 = vld [vmem:[#allocation2 + $0x120] sm:$0xff]
        %v360 = vld [vmem:[#allocation2 + $0x128] sm:$0xff]
        %v361 = vld [vmem:[#allocation2 + $0x130] sm:$0x3]
        %v362 = vld [vmem:[#allocation2 + $0x138] sm:$0xff]
        %v363 = vld [vmem:[#allocation2 + $0x140] sm:$0xff]
        %v364 = vld [vmem:[#allocation2 + $0x148] sm:$0x3]
        %v365 = vld [vmem:[#allocation2 + $0x150] sm:$0xff]
        %v366 = vld [vmem:[#allocation2 + $0x158] sm:$0xff]
        %v367 = vld [vmem:[#allocation2 + $0x160] sm:$0x3]
        %v368 = vld [vmem:[#allocation2 + $0x168] sm:$0xff]
        %v369 = vld [vmem:[#allocation2 + $0x170] sm:$0xff]
        %v370 = vld [vmem:[#allocation2 + $0x178] sm:$0x3]
        %v371 = vld [vmem:[#allocation2 + $0x180] sm:$0xff]
        %v372 = vld [vmem:[#allocation2 + $0x188] sm:$0xff]
        %v373 = vld [vmem:[#allocation2 + $0x190] sm:$0x3]
        %v374 = vld [vmem:[#allocation2 + $0x198] sm:$0xff]
        %v375 = vld [vmem:[#allocation2 + $0x1a0] sm:$0xff]
        %v376 = vld [vmem:[#allocation2 + $0x1a8] sm:$0x3]
        %v377 = vld [vmem:[%s2] sm:$0x1]
        %v379 = vlaneseq
        %v380 = vshrl.u32 %v379, 7
        %v381 = vsub.s32 0, %v380
        %v382 = vrot.slane %v377, %v381
        %vm432 = vcmask 1046528
        %v433 = vrot.slane %v323, 1
        %v434 = vrot.slane %v324, 1
        %v435 = vsel %vm432, %v433, %v434
        %v436 = vrot.slane %v325, 1
        %v437 = vsel %vm432, %v434, %v436
        %v438 = vrot.slane %v326, 1
        %v439 = vrot.slane %v327, 1
        %v440 = vsel %vm432, %v438, %v439
        %v441 = vrot.slane %v328, 1
        %v442 = vsel %vm432, %v439, %v441
        %v443 = vrot.slane %v329, 1
        %v444 = vrot.slane %v330, 1
        %v445 = vsel %vm432, %v443, %v444
        %v446 = vrot.slane %v331, 1
        %v447 = vsel %vm432, %v444, %v446
        %v448 = vrot.slane %v332, 1
        %v449 = vrot.slane %v333, 1
        %v450 = vsel %vm432, %v448, %v449
        %v451 = vrot.slane %v334, 1
        %v452 = vsel %vm432, %v449, %v451
        %v453 = vrot.slane %v335, 1
        %v454 = vrot.slane %v336, 1
        %v455 = vsel %vm432, %v453, %v454
        %v456 = vrot.slane %v337, 1
        %v457 = vsel %vm432, %v454, %v456
        %v458 = vrot.slane %v338, 1
        %v459 = vrot.slane %v339, 1
        %v460 = vsel %vm432, %v458, %v459
        %v461 = vrot.slane %v340, 1
        %v462 = vsel %vm432, %v459, %v461
        %v463 = vrot.slane %v341, 1
        %v464 = vrot.slane %v342, 1
        %v465 = vsel %vm432, %v463, %v464
        %v466 = vrot.slane %v343, 1
        %v467 = vsel %vm432, %v464, %v466
        %v468 = vrot.slane %v344, 1
        %v469 = vrot.slane %v345, 1
        %v470 = vsel %vm432, %v468, %v469
        %v471 = vrot.slane %v346, 1
        %v472 = vsel %vm432, %v469, %v471
        %v473 = vrot.slane %v347, 1
        %v474 = vrot.slane %v348, 1
        %v475 = vsel %vm432, %v473, %v474
        %v476 = vrot.slane %v349, 1
        %v477 = vsel %vm432, %v474, %v476
        %v478 = vrot.slane %v350, 1
        %v479 = vrot.slane %v351, 1
        %v480 = vsel %vm432, %v478, %v479
        %v481 = vrot.slane %v352, 1
        %v482 = vsel %vm432, %v479, %v481
        %v483 = vrot.slane %v353, 1
        %v484 = vrot.slane %v354, 1
        %v485 = vsel %vm432, %v483, %v484
        %v486 = vrot.slane %v355, 1
        %v487 = vsel %vm432, %v484, %v486
        %v488 = vrot.slane %v356, 1
        %v489 = vrot.slane %v357, 1
        %v490 = vsel %vm432, %v488, %v489
        %v491 = vrot.slane %v358, 1
        %v492 = vsel %vm432, %v489, %v491
        %v493 = vrot.slane %v359, 1
        %v494 = vrot.slane %v360, 1
        %v495 = vsel %vm432, %v493, %v494
        %v496 = vrot.slane %v361, 1
        %v497 = vsel %vm432, %v494, %v496
        %v498 = vrot.slane %v362, 1
        %v499 = vrot.slane %v363, 1
        %v500 = vsel %vm432, %v498, %v499
        %v501 = vrot.slane %v364, 1
        %v502 = vsel %vm432, %v499, %v501
        %v503 = vrot.slane %v365, 1
        %v504 = vrot.slane %v366, 1
        %v505 = vsel %vm432, %v503, %v504
        %v506 = vrot.slane %v367, 1
        %v507 = vsel %vm432, %v504, %v506
        %v508 = vrot.slane %v368, 1
        %v509 = vrot.slane %v369, 1
        %v510 = vsel %vm432, %v508, %v509
        %v511 = vrot.slane %v370, 1
        %v512 = vsel %vm432, %v509, %v511
        %513 = vrot.lane.b32.xlu0 %v435, 3
        %v514 = vpop.permute.xlu0 %513
        %515 = vrot.lane.b32.xlu0 %v437, 3
        %v516 = vpop.permute.xlu0 %515
        %517 = vrot.lane.b32.xlu0 %v440, 3
        %v518 = vpop.permute.xlu0 %517
        %519 = vrot.lane.b32.xlu0 %v442, 3
        %v520 = vpop.permute.xlu0 %519
        %521 = vrot.lane.b32.xlu0 %v445, 3
        %v522 = vpop.permute.xlu0 %521
        %523 = vrot.lane.b32.xlu0 %v447, 3
        %v524 = vpop.permute.xlu0 %523
        %525 = vrot.lane.b32.xlu0 %v450, 3
        %v526 = vpop.permute.xlu0 %525
        %527 = vrot.lane.b32.xlu0 %v452, 3
        %v528 = vpop.permute.xlu0 %527
        %529 = vrot.lane.b32.xlu0 %v455, 3
        %v530 = vpop.permute.xlu0 %529
        %531 = vrot.lane.b32.xlu0 %v457, 3
        %v532 = vpop.permute.xlu0 %531
        %533 = vrot.lane.b32.xlu0 %v460, 3
        %v534 = vpop.permute.xlu0 %533
        %535 = vrot.lane.b32.xlu0 %v462, 3
        %v536 = vpop.permute.xlu0 %535
        %537 = vrot.lane.b32.xlu0 %v465, 3
        %v538 = vpop.permute.xlu0 %537
        %539 = vrot.lane.b32.xlu0 %v467, 3
        %v540 = vpop.permute.xlu0 %539
        %541 = vrot.lane.b32.xlu0 %v470, 3
        %v542 = vpop.permute.xlu0 %541
        %543 = vrot.lane.b32.xlu0 %v472, 3
        %v544 = vpop.permute.xlu0 %543
        %545 = vrot.lane.b32.xlu0 %v475, 3
        %v546 = vpop.permute.xlu0 %545
        %547 = vrot.lane.b32.xlu0 %v477, 3
        %v548 = vpop.permute.xlu0 %547
        %549 = vrot.lane.b32.xlu0 %v480, 3
        %v550 = vpop.permute.xlu0 %549
        %551 = vrot.lane.b32.xlu0 %v482, 3
        %v552 = vpop.permute.xlu0 %551
        %553 = vrot.lane.b32.xlu0 %v485, 3
        %v554 = vpop.permute.xlu0 %553
        %555 = vrot.lane.b32.xlu0 %v487, 3
        %v556 = vpop.permute.xlu0 %555
        %557 = vrot.lane.b32.xlu0 %v490, 3
        %v558 = vpop.permute.xlu0 %557
        %559 = vrot.lane.b32.xlu0 %v492, 3
        %v560 = vpop.permute.xlu0 %559
        %561 = vrot.lane.b32.xlu0 %v495, 3
        %v562 = vpop.permute.xlu0 %561
        %563 = vrot.lane.b32.xlu0 %v497, 3
        %v564 = vpop.permute.xlu0 %563
        %565 = vrot.lane.b32.xlu0 %v500, 3
        %v566 = vpop.permute.xlu0 %565
        %567 = vrot.lane.b32.xlu0 %v502, 3
        %v568 = vpop.permute.xlu0 %567
        %569 = vrot.lane.b32.xlu0 %v505, 3
        %v570 = vpop.permute.xlu0 %569
        %571 = vrot.lane.b32.xlu0 %v507, 3
        %v572 = vpop.permute.xlu0 %571
        %573 = vrot.lane.b32.xlu0 %v510, 3
        %v574 = vpop.permute.xlu0 %573
        %575 = vrot.lane.b32.xlu0 %v512, 3
        %v576 = vpop.permute.xlu0 %575
        %vm609 = vcmask 1045504
        %v610 = vrot.slane %v323, 2
        %v611 = vrot.slane %v324, 2
        %v612 = vsel %vm609, %v610, %v611
        %v613 = vrot.slane %v325, 2
        %v614 = vsel %vm609, %v611, %v613
        %v615 = vrot.slane %v326, 2
        %v616 = vrot.slane %v327, 2
        %v617 = vsel %vm609, %v615, %v616
        %v618 = vrot.slane %v328, 2
        %v619 = vsel %vm609, %v616, %v618
        %v620 = vrot.slane %v329, 2
        %v621 = vrot.slane %v330, 2
        %v622 = vsel %vm609, %v620, %v621
        %v623 = vrot.slane %v331, 2
        %v624 = vsel %vm609, %v621, %v623
        %v625 = vrot.slane %v332, 2
        %v626 = vrot.slane %v333, 2
        %v627 = vsel %vm609, %v625, %v626
        %v628 = vrot.slane %v334, 2
        %v629 = vsel %vm609, %v626, %v628
        %v630 = vrot.slane %v335, 2
        %v631 = vrot.slane %v336, 2
        %v632 = vsel %vm609, %v630, %v631
        %v633 = vrot.slane %v337, 2
        %v634 = vsel %vm609, %v631, %v633
        %v635 = vrot.slane %v338, 2
        %v636 = vrot.slane %v339, 2
        %v637 = vsel %vm609, %v635, %v636
        %v638 = vrot.slane %v340, 2
        %v639 = vsel %vm609, %v636, %v638
        %v640 = vrot.slane %v341, 2
        %v641 = vrot.slane %v342, 2
        %v642 = vsel %vm609, %v640, %v641
        %v643 = vrot.slane %v343, 2
        %v644 = vsel %vm609, %v641, %v643
        %v645 = vrot.slane %v344, 2
        %v646 = vrot.slane %v345, 2
        %v647 = vsel %vm609, %v645, %v646
        %v648 = vrot.slane %v346, 2
        %v649 = vsel %vm609, %v646, %v648
        %v650 = vrot.slane %v347, 2
        %v651 = vrot.slane %v348, 2
        %v652 = vsel %vm609, %v650, %v651
        %v653 = vrot.slane %v349, 2
        %v654 = vsel %vm609, %v651, %v653
        %v655 = vrot.slane %v350, 2
        %v656 = vrot.slane %v351, 2
        %v657 = vsel %vm609, %v655, %v656
        %v658 = vrot.slane %v352, 2
        %v659 = vsel %vm609, %v656, %v658
        %v660 = vrot.slane %v353, 2
        %v661 = vrot.slane %v354, 2
        %v662 = vsel %vm609, %v660, %v661
        %v663 = vrot.slane %v355, 2
        %v664 = vsel %vm609, %v661, %v663
        %v665 = vrot.slane %v356, 2
        %v666 = vrot.slane %v357, 2
        %v667 = vsel %vm609, %v665, %v666
        %v668 = vrot.slane %v358, 2
        %v669 = vsel %vm609, %v666, %v668
        %v670 = vrot.slane %v359, 2
        %v671 = vrot.slane %v360, 2
        %v672 = vsel %vm609, %v670, %v671
        %v673 = vrot.slane %v361, 2
        %v674 = vsel %vm609, %v671, %v673
        %v675 = vrot.slane %v362, 2
        %v676 = vrot.slane %v363, 2
        %v677 = vsel %vm609, %v675, %v676
        %v678 = vrot.slane %v364, 2
        %v679 = vsel %vm609, %v676, %v678
        %v680 = vrot.slane %v365, 2
        %v681 = vrot.slane %v366, 2
        %v682 = vsel %vm609, %v680, %v681
        %v683 = vrot.slane %v367, 2
        %v684 = vsel %vm609, %v681, %v683
        %v685 = vrot.slane %v368, 2
        %v686 = vrot.slane %v369, 2
        %v687 = vsel %vm609, %v685, %v686
        %v688 = vrot.slane %v370, 2
        %v689 = vsel %vm609, %v686, %v688
        %690 = vrot.lane.b32.xlu0 %v612, 6
        %v691 = vpop.permute.xlu0 %690
        %692 = vrot.lane.b32.xlu0 %v614, 6
        %v693 = vpop.permute.xlu0 %692
        %694 = vrot.lane.b32.xlu0 %v617, 6
        %v695 = vpop.permute.xlu0 %694
        %696 = vrot.lane.b32.xlu0 %v619, 6
        %v697 = vpop.permute.xlu0 %696
        %698 = vrot.lane.b32.xlu0 %v622, 6
        %v699 = vpop.permute.xlu0 %698
        %700 = vrot.lane.b32.xlu0 %v624, 6
        %v701 = vpop.permute.xlu0 %700
        %702 = vrot.lane.b32.xlu0 %v627, 6
        %v703 = vpop.permute.xlu0 %702
        %704 = vrot.lane.b32.xlu0 %v629, 6
        %v705 = vpop.permute.xlu0 %704
        %706 = vrot.lane.b32.xlu0 %v632, 6
        %v707 = vpop.permute.xlu0 %706
        %708 = vrot.lane.b32.xlu0 %v634, 6
        %v709 = vpop.permute.xlu0 %708
        %710 = vrot.lane.b32.xlu0 %v637, 6
        %v711 = vpop.permute.xlu0 %710
        %712 = vrot.lane.b32.xlu0 %v639, 6
        %v713 = vpop.permute.xlu0 %712
        %714 = vrot.lane.b32.xlu0 %v642, 6
        %v715 = vpop.permute.xlu0 %714
        %716 = vrot.lane.b32.xlu0 %v644, 6
        %v717 = vpop.permute.xlu0 %716
        %718 = vrot.lane.b32.xlu0 %v647, 6
        %v719 = vpop.permute.xlu0 %718
        %720 = vrot.lane.b32.xlu0 %v649, 6
        %v721 = vpop.permute.xlu0 %720
        %722 = vrot.lane.b32.xlu0 %v652, 6
        %v723 = vpop.permute.xlu0 %722
        %724 = vrot.lane.b32.xlu0 %v654, 6
        %v725 = vpop.permute.xlu0 %724
        %726 = vrot.lane.b32.xlu0 %v657, 6
        %v727 = vpop.permute.xlu0 %726
        %728 = vrot.lane.b32.xlu0 %v659, 6
        %v729 = vpop.permute.xlu0 %728
        %730 = vrot.lane.b32.xlu0 %v662, 6
        %v731 = vpop.permute.xlu0 %730
        %732 = vrot.lane.b32.xlu0 %v664, 6
        %v733 = vpop.permute.xlu0 %732
        %734 = vrot.lane.b32.xlu0 %v667, 6
        %v735 = vpop.permute.xlu0 %734
        %736 = vrot.lane.b32.xlu0 %v669, 6
        %v737 = vpop.permute.xlu0 %736
        %738 = vrot.lane.b32.xlu0 %v672, 6
        %v739 = vpop.permute.xlu0 %738
        %740 = vrot.lane.b32.xlu0 %v674, 6
        %v741 = vpop.permute.xlu0 %740
        %742 = vrot.lane.b32.xlu0 %v677, 6
        %v743 = vpop.permute.xlu0 %742
        %744 = vrot.lane.b32.xlu0 %v679, 6
        %v745 = vpop.permute.xlu0 %744
        %746 = vrot.lane.b32.xlu0 %v682, 6
        %v747 = vpop.permute.xlu0 %746
        %748 = vrot.lane.b32.xlu0 %v684, 6
        %v749 = vpop.permute.xlu0 %748
        %750 = vrot.lane.b32.xlu0 %v687, 6
        %v751 = vpop.permute.xlu0 %750
        %752 = vrot.lane.b32.xlu0 %v689, 6
        %v753 = vpop.permute.xlu0 %752
        %788 = vrot.lane.b32.xlu0 %v326, 9
        %v789 = vpop.permute.xlu0 %788
        %790 = vrot.lane.b32.xlu0 %v327, 9
        %v791 = vpop.permute.xlu0 %790
        %792 = vrot.lane.b32.xlu0 %v329, 9
        %v793 = vpop.permute.xlu0 %792
        %794 = vrot.lane.b32.xlu0 %v330, 9
        %v795 = vpop.permute.xlu0 %794
        %796 = vrot.lane.b32.xlu0 %v332, 9
        %v797 = vpop.permute.xlu0 %796
        %798 = vrot.lane.b32.xlu0 %v333, 9
        %v799 = vpop.permute.xlu0 %798
        %800 = vrot.lane.b32.xlu0 %v335, 9
        %v801 = vpop.permute.xlu0 %800
        %802 = vrot.lane.b32.xlu0 %v336, 9
        %v803 = vpop.permute.xlu0 %802
        %804 = vrot.lane.b32.xlu0 %v338, 9
        %v805 = vpop.permute.xlu0 %804
        %806 = vrot.lane.b32.xlu0 %v339, 9
        %v807 = vpop.permute.xlu0 %806
        %808 = vrot.lane.b32.xlu0 %v341, 9
        %v809 = vpop.permute.xlu0 %808
        %810 = vrot.lane.b32.xlu0 %v342, 9
        %v811 = vpop.permute.xlu0 %810
        %812 = vrot.lane.b32.xlu0 %v344, 9
        %v813 = vpop.permute.xlu0 %812
        %814 = vrot.lane.b32.xlu0 %v345, 9
        %v815 = vpop.permute.xlu0 %814
        %816 = vrot.lane.b32.xlu0 %v347, 9
        %v817 = vpop.permute.xlu0 %816
        %818 = vrot.lane.b32.xlu0 %v348, 9
        %v819 = vpop.permute.xlu0 %818
        %820 = vrot.lane.b32.xlu0 %v350, 9
        %v821 = vpop.permute.xlu0 %820
        %822 = vrot.lane.b32.xlu0 %v351, 9
        %v823 = vpop.permute.xlu0 %822
        %824 = vrot.lane.b32.xlu0 %v353, 9
        %v825 = vpop.permute.xlu0 %824
        %826 = vrot.lane.b32.xlu0 %v354, 9
        %v827 = vpop.permute.xlu0 %826
        %828 = vrot.lane.b32.xlu0 %v356, 9
        %v829 = vpop.permute.xlu0 %828
        %830 = vrot.lane.b32.xlu0 %v357, 9
        %v831 = vpop.permute.xlu0 %830
        %832 = vrot.lane.b32.xlu0 %v359, 9
        %v833 = vpop.permute.xlu0 %832
        %834 = vrot.lane.b32.xlu0 %v360, 9
        %v835 = vpop.permute.xlu0 %834
        %836 = vrot.lane.b32.xlu0 %v362, 9
        %v837 = vpop.permute.xlu0 %836
        %838 = vrot.lane.b32.xlu0 %v363, 9
        %v839 = vpop.permute.xlu0 %838
        %840 = vrot.lane.b32.xlu0 %v365, 9
        %v841 = vpop.permute.xlu0 %840
        %842 = vrot.lane.b32.xlu0 %v366, 9
        %v843 = vpop.permute.xlu0 %842
        %844 = vrot.lane.b32.xlu0 %v368, 9
        %v845 = vpop.permute.xlu0 %844
        %846 = vrot.lane.b32.xlu0 %v369, 9
        %v847 = vpop.permute.xlu0 %846
        %848 = vrot.lane.b32.xlu0 %v371, 9
        %v849 = vpop.permute.xlu0 %848
        %850 = vrot.lane.b32.xlu0 %v372, 9
        %v851 = vpop.permute.xlu0 %850
        %v885 = vrot.slane %v371, 1
        %v886 = vrot.slane %v372, 1
        %v887 = vsel %vm432, %v885, %v886
        %v888 = vrot.slane %v373, 1
        %v889 = vsel %vm432, %v886, %v888
        %890 = vrot.lane.b32.xlu0 %v440, 12
        %v891 = vpop.permute.xlu0 %890
        %892 = vrot.lane.b32.xlu0 %v442, 12
        %v893 = vpop.permute.xlu0 %892
        %894 = vrot.lane.b32.xlu0 %v445, 12
        %v895 = vpop.permute.xlu0 %894
        %896 = vrot.lane.b32.xlu0 %v447, 12
        %v897 = vpop.permute.xlu0 %896
        %898 = vrot.lane.b32.xlu0 %v450, 12
        %v899 = vpop.permute.xlu0 %898
        %900 = vrot.lane.b32.xlu0 %v452, 12
        %v901 = vpop.permute.xlu0 %900
        %902 = vrot.lane.b32.xlu0 %v455, 12
        %v903 = vpop.permute.xlu0 %902
        %904 = vrot.lane.b32.xlu0 %v457, 12
        %v905 = vpop.permute.xlu0 %904
        %906 = vrot.lane.b32.xlu0 %v460, 12
        %v907 = vpop.permute.xlu0 %906
        %908 = vrot.lane.b32.xlu0 %v462, 12
        %v909 = vpop.permute.xlu0 %908
        %910 = vrot.lane.b32.xlu0 %v465, 12
        %v911 = vpop.permute.xlu0 %910
        %912 = vrot.lane.b32.xlu0 %v467, 12
        %v913 = vpop.permute.xlu0 %912
        %914 = vrot.lane.b32.xlu0 %v470, 12
        %v915 = vpop.permute.xlu0 %914
        %916 = vrot.lane.b32.xlu0 %v472, 12
        %v917 = vpop.permute.xlu0 %916
        %918 = vrot.lane.b32.xlu0 %v475, 12
        %v919 = vpop.permute.xlu0 %918
        %920 = vrot.lane.b32.xlu0 %v477, 12
        %v921 = vpop.permute.xlu0 %920
        %922 = vrot.lane.b32.xlu0 %v480, 12
        %v923 = vpop.permute.xlu0 %922
        %924 = vrot.lane.b32.xlu0 %v482, 12
        %v925 = vpop.permute.xlu0 %924
        %926 = vrot.lane.b32.xlu0 %v485, 12
        %v927 = vpop.permute.xlu0 %926
        %928 = vrot.lane.b32.xlu0 %v487, 12
        %v929 = vpop.permute.xlu0 %928
        %930 = vrot.lane.b32.xlu0 %v490, 12
        %v931 = vpop.permute.xlu0 %930
        %932 = vrot.lane.b32.xlu0 %v492, 12
        %v933 = vpop.permute.xlu0 %932
        %934 = vrot.lane.b32.xlu0 %v495, 12
        %v935 = vpop.permute.xlu0 %934
        %936 = vrot.lane.b32.xlu0 %v497, 12
        %v937 = vpop.permute.xlu0 %936
        %938 = vrot.lane.b32.xlu0 %v500, 12
        %v939 = vpop.permute.xlu0 %938
        %940 = vrot.lane.b32.xlu0 %v502, 12
        %v941 = vpop.permute.xlu0 %940
        %942 = vrot.lane.b32.xlu0 %v505, 12
        %v943 = vpop.permute.xlu0 %942
        %944 = vrot.lane.b32.xlu0 %v507, 12
        %v945 = vpop.permute.xlu0 %944
        %946 = vrot.lane.b32.xlu0 %v510, 12
        %v947 = vpop.permute.xlu0 %946
        %948 = vrot.lane.b32.xlu0 %v512, 12
        %v949 = vpop.permute.xlu0 %948
        %950 = vrot.lane.b32.xlu0 %v887, 12
        %v951 = vpop.permute.xlu0 %950
        %952 = vrot.lane.b32.xlu0 %v889, 12
        %v953 = vpop.permute.xlu0 %952
        %v986 = vrot.slane %v371, 2
        %v987 = vrot.slane %v372, 2
        %v988 = vsel %vm609, %v986, %v987
        %v989 = vrot.slane %v373, 2
        %v990 = vsel %vm609, %v987, %v989
        %991 = vrot.lane.b32.xlu0 %v617, 15
        %v992 = vpop.permute.xlu0 %991
        %993 = vrot.lane.b32.xlu0 %v619, 15
        %v994 = vpop.permute.xlu0 %993
        %995 = vrot.lane.b32.xlu0 %v622, 15
        %v996 = vpop.permute.xlu0 %995
        %997 = vrot.lane.b32.xlu0 %v624, 15
        %v998 = vpop.permute.xlu0 %997
        %999 = vrot.lane.b32.xlu0 %v627, 15
        %v1000 = vpop.permute.xlu0 %999
        %1001 = vrot.lane.b32.xlu0 %v629, 15
        %v1002 = vpop.permute.xlu0 %1001
        %1003 = vrot.lane.b32.xlu0 %v632, 15
        %v1004 = vpop.permute.xlu0 %1003
        %1005 = vrot.lane.b32.xlu0 %v634, 15
        %v1006 = vpop.permute.xlu0 %1005
        %1007 = vrot.lane.b32.xlu0 %v637, 15
        %v1008 = vpop.permute.xlu0 %1007
        %1009 = vrot.lane.b32.xlu0 %v639, 15
        %v1010 = vpop.permute.xlu0 %1009
        %1011 = vrot.lane.b32.xlu0 %v642, 15
        %v1012 = vpop.permute.xlu0 %1011
        %1013 = vrot.lane.b32.xlu0 %v644, 15
        %v1014 = vpop.permute.xlu0 %1013
        %1015 = vrot.lane.b32.xlu0 %v647, 15
        %v1016 = vpop.permute.xlu0 %1015
        %1017 = vrot.lane.b32.xlu0 %v649, 15
        %v1018 = vpop.permute.xlu0 %1017
        %1019 = vrot.lane.b32.xlu0 %v652, 15
        %v1020 = vpop.permute.xlu0 %1019
        %1021 = vrot.lane.b32.xlu0 %v654, 15
        %v1022 = vpop.permute.xlu0 %1021
        %1023 = vrot.lane.b32.xlu0 %v657, 15
        %v1024 = vpop.permute.xlu0 %1023
        %1025 = vrot.lane.b32.xlu0 %v659, 15
        %v1026 = vpop.permute.xlu0 %1025
        %1027 = vrot.lane.b32.xlu0 %v662, 15
        %v1028 = vpop.permute.xlu0 %1027
        %1029 = vrot.lane.b32.xlu0 %v664, 15
        %v1030 = vpop.permute.xlu0 %1029
        %1031 = vrot.lane.b32.xlu0 %v667, 15
        %v1032 = vpop.permute.xlu0 %1031
        %1033 = vrot.lane.b32.xlu0 %v669, 15
        %v1034 = vpop.permute.xlu0 %1033
        %1035 = vrot.lane.b32.xlu0 %v672, 15
        %v1036 = vpop.permute.xlu0 %1035
        %1037 = vrot.lane.b32.xlu0 %v674, 15
        %v1038 = vpop.permute.xlu0 %1037
        %1039 = vrot.lane.b32.xlu0 %v677, 15
        %v1040 = vpop.permute.xlu0 %1039
        %1041 = vrot.lane.b32.xlu0 %v679, 15
        %v1042 = vpop.permute.xlu0 %1041
        %1043 = vrot.lane.b32.xlu0 %v682, 15
        %v1044 = vpop.permute.xlu0 %1043
        %1045 = vrot.lane.b32.xlu0 %v684, 15
        %v1046 = vpop.permute.xlu0 %1045
        %1047 = vrot.lane.b32.xlu0 %v687, 15
        %v1048 = vpop.permute.xlu0 %1047
        %1049 = vrot.lane.b32.xlu0 %v689, 15
        %v1050 = vpop.permute.xlu0 %1049
        %1051 = vrot.lane.b32.xlu0 %v988, 15
        %v1052 = vpop.permute.xlu0 %1051
        %1053 = vrot.lane.b32.xlu0 %v990, 15
        %v1054 = vpop.permute.xlu0 %1053
        %1089 = vrot.lane.b32.xlu0 %v329, 18
        %v1090 = vpop.permute.xlu0 %1089
        %1091 = vrot.lane.b32.xlu0 %v330, 18
        %v1092 = vpop.permute.xlu0 %1091
        %1093 = vrot.lane.b32.xlu0 %v332, 18
        %v1094 = vpop.permute.xlu0 %1093
        %1095 = vrot.lane.b32.xlu0 %v333, 18
        %v1096 = vpop.permute.xlu0 %1095
        %1097 = vrot.lane.b32.xlu0 %v335, 18
        %v1098 = vpop.permute.xlu0 %1097
        %1099 = vrot.lane.b32.xlu0 %v336, 18
        %v1100 = vpop.permute.xlu0 %1099
        %1101 = vrot.lane.b32.xlu0 %v338, 18
        %v1102 = vpop.permute.xlu0 %1101
        %1103 = vrot.lane.b32.xlu0 %v339, 18
        %v1104 = vpop.permute.xlu0 %1103
        %1105 = vrot.lane.b32.xlu0 %v341, 18
        %v1106 = vpop.permute.xlu0 %1105
        %1107 = vrot.lane.b32.xlu0 %v342, 18
        %v1108 = vpop.permute.xlu0 %1107
        %1109 = vrot.lane.b32.xlu0 %v344, 18
        %v1110 = vpop.permute.xlu0 %1109
        %1111 = vrot.lane.b32.xlu0 %v345, 18
        %v1112 = vpop.permute.xlu0 %1111
        %1113 = vrot.lane.b32.xlu0 %v347, 18
        %v1114 = vpop.permute.xlu0 %1113
        %1115 = vrot.lane.b32.xlu0 %v348, 18
        %v1116 = vpop.permute.xlu0 %1115
        %1117 = vrot.lane.b32.xlu0 %v350, 18
        %v1118 = vpop.permute.xlu0 %1117
        %1119 = vrot.lane.b32.xlu0 %v351, 18
        %v1120 = vpop.permute.xlu0 %1119
        %1121 = vrot.lane.b32.xlu0 %v353, 18
        %v1122 = vpop.permute.xlu0 %1121
        %1123 = vrot.lane.b32.xlu0 %v354, 18
        %v1124 = vpop.permute.xlu0 %1123
        %1125 = vrot.lane.b32.xlu0 %v356, 18
        %v1126 = vpop.permute.xlu0 %1125
        %1127 = vrot.lane.b32.xlu0 %v357, 18
        %v1128 = vpop.permute.xlu0 %1127
        %1129 = vrot.lane.b32.xlu0 %v359, 18
        %v1130 = vpop.permute.xlu0 %1129
        %1131 = vrot.lane.b32.xlu0 %v360, 18
        %v1132 = vpop.permute.xlu0 %1131
        %1133 = vrot.lane.b32.xlu0 %v362, 18
        %v1134 = vpop.permute.xlu0 %1133
        %1135 = vrot.lane.b32.xlu0 %v363, 18
        %v1136 = vpop.permute.xlu0 %1135
        %1137 = vrot.lane.b32.xlu0 %v365, 18
        %v1138 = vpop.permute.xlu0 %1137
        %1139 = vrot.lane.b32.xlu0 %v366, 18
        %v1140 = vpop.permute.xlu0 %1139
        %1141 = vrot.lane.b32.xlu0 %v368, 18
        %v1142 = vpop.permute.xlu0 %1141
        %1143 = vrot.lane.b32.xlu0 %v369, 18
        %v1144 = vpop.permute.xlu0 %1143
        %1145 = vrot.lane.b32.xlu0 %v371, 18
        %v1146 = vpop.permute.xlu0 %1145
        %1147 = vrot.lane.b32.xlu0 %v372, 18
        %v1148 = vpop.permute.xlu0 %1147
        %1149 = vrot.lane.b32.xlu0 %v374, 18
        %v1150 = vpop.permute.xlu0 %1149
        %1151 = vrot.lane.b32.xlu0 %v375, 18
        %v1152 = vpop.permute.xlu0 %1151
        %v1186 = vrot.slane %v374, 1
        %v1187 = vrot.slane %v375, 1
        %v1188 = vsel %vm432, %v1186, %v1187
        %v1189 = vrot.slane %v376, 1
        %v1190 = vsel %vm432, %v1187, %v1189
        %1191 = vrot.lane.b32.xlu0 %v445, 21
        %v1192 = vpop.permute.xlu0 %1191
        %1193 = vrot.lane.b32.xlu0 %v447, 21
        %v1194 = vpop.permute.xlu0 %1193
        %1195 = vrot.lane.b32.xlu0 %v450, 21
        %v1196 = vpop.permute.xlu0 %1195
        %1197 = vrot.lane.b32.xlu0 %v452, 21
        %v1198 = vpop.permute.xlu0 %1197
        %1199 = vrot.lane.b32.xlu0 %v455, 21
        %v1200 = vpop.permute.xlu0 %1199
        %1201 = vrot.lane.b32.xlu0 %v457, 21
        %v1202 = vpop.permute.xlu0 %1201
        %1203 = vrot.lane.b32.xlu0 %v460, 21
        %v1204 = vpop.permute.xlu0 %1203
        %1205 = vrot.lane.b32.xlu0 %v462, 21
        %v1206 = vpop.permute.xlu0 %1205
        %1207 = vrot.lane.b32.xlu0 %v465, 21
        %v1208 = vpop.permute.xlu0 %1207
        %1209 = vrot.lane.b32.xlu0 %v467, 21
        %v1210 = vpop.permute.xlu0 %1209
        %1211 = vrot.lane.b32.xlu0 %v470, 21
        %v1212 = vpop.permute.xlu0 %1211
        %1213 = vrot.lane.b32.xlu0 %v472, 21
        %v1214 = vpop.permute.xlu0 %1213
        %1215 = vrot.lane.b32.xlu0 %v475, 21
        %v1216 = vpop.permute.xlu0 %1215
        %1217 = vrot.lane.b32.xlu0 %v477, 21
        %v1218 = vpop.permute.xlu0 %1217
        %1219 = vrot.lane.b32.xlu0 %v480, 21
        %v1220 = vpop.permute.xlu0 %1219
        %1221 = vrot.lane.b32.xlu0 %v482, 21
        %v1222 = vpop.permute.xlu0 %1221
        %1223 = vrot.lane.b32.xlu0 %v485, 21
        %v1224 = vpop.permute.xlu0 %1223
        %1225 = vrot.lane.b32.xlu0 %v487, 21
        %v1226 = vpop.permute.xlu0 %1225
        %1227 = vrot.lane.b32.xlu0 %v490, 21
        %v1228 = vpop.permute.xlu0 %1227
        %1229 = vrot.lane.b32.xlu0 %v492, 21
        %v1230 = vpop.permute.xlu0 %1229
        %1231 = vrot.lane.b32.xlu0 %v495, 21
        %v1232 = vpop.permute.xlu0 %1231
        %1233 = vrot.lane.b32.xlu0 %v497, 21
        %v1234 = vpop.permute.xlu0 %1233
        %1235 = vrot.lane.b32.xlu0 %v500, 21
        %v1236 = vpop.permute.xlu0 %1235
        %1237 = vrot.lane.b32.xlu0 %v502, 21
        %v1238 = vpop.permute.xlu0 %1237
        %1239 = vrot.lane.b32.xlu0 %v505, 21
        %v1240 = vpop.permute.xlu0 %1239
        %1241 = vrot.lane.b32.xlu0 %v507, 21
        %v1242 = vpop.permute.xlu0 %1241
        %1243 = vrot.lane.b32.xlu0 %v510, 21
        %v1244 = vpop.permute.xlu0 %1243
        %1245 = vrot.lane.b32.xlu0 %v512, 21
        %v1246 = vpop.permute.xlu0 %1245
        %1247 = vrot.lane.b32.xlu0 %v887, 21
        %v1248 = vpop.permute.xlu0 %1247
        %1249 = vrot.lane.b32.xlu0 %v889, 21
        %v1250 = vpop.permute.xlu0 %1249
        %1251 = vrot.lane.b32.xlu0 %v1188, 21
        %v1252 = vpop.permute.xlu0 %1251
        %1253 = vrot.lane.b32.xlu0 %v1190, 21
        %v1254 = vpop.permute.xlu0 %1253
        %v1287 = vrot.slane %v374, 2
        %v1288 = vrot.slane %v375, 2
        %v1289 = vsel %vm609, %v1287, %v1288
        %v1290 = vrot.slane %v376, 2
        %v1291 = vsel %vm609, %v1288, %v1290
        %1292 = vrot.lane.b32.xlu0 %v622, 24
        %v1293 = vpop.permute.xlu0 %1292
        %1294 = vrot.lane.b32.xlu0 %v624, 24
        %v1295 = vpop.permute.xlu0 %1294
        %1296 = vrot.lane.b32.xlu0 %v627, 24
        %v1297 = vpop.permute.xlu0 %1296
        %1298 = vrot.lane.b32.xlu0 %v629, 24
        %v1299 = vpop.permute.xlu0 %1298
        %1300 = vrot.lane.b32.xlu0 %v632, 24
        %v1301 = vpop.permute.xlu0 %1300
        %1302 = vrot.lane.b32.xlu0 %v634, 24
        %v1303 = vpop.permute.xlu0 %1302
        %1304 = vrot.lane.b32.xlu0 %v637, 24
        %v1305 = vpop.permute.xlu0 %1304
        %1306 = vrot.lane.b32.xlu0 %v639, 24
        %v1307 = vpop.permute.xlu0 %1306
        %1308 = vrot.lane.b32.xlu0 %v642, 24
        %v1309 = vpop.permute.xlu0 %1308
        %1310 = vrot.lane.b32.xlu0 %v644, 24
        %v1311 = vpop.permute.xlu0 %1310
        %1312 = vrot.lane.b32.xlu0 %v647, 24
        %v1313 = vpop.permute.xlu0 %1312
        %1314 = vrot.lane.b32.xlu0 %v649, 24
        %v1315 = vpop.permute.xlu0 %1314
        %1316 = vrot.lane.b32.xlu0 %v652, 24
        %v1317 = vpop.permute.xlu0 %1316
        %1318 = vrot.lane.b32.xlu0 %v654, 24
        %v1319 = vpop.permute.xlu0 %1318
        %1320 = vrot.lane.b32.xlu0 %v657, 24
        %v1321 = vpop.permute.xlu0 %1320
        %1322 = vrot.lane.b32.xlu0 %v659, 24
        %v1323 = vpop.permute.xlu0 %1322
        %1324 = vrot.lane.b32.xlu0 %v662, 24
        %v1325 = vpop.permute.xlu0 %1324
        %1326 = vrot.lane.b32.xlu0 %v664, 24
        %v1327 = vpop.permute.xlu0 %1326
        %1328 = vrot.lane.b32.xlu0 %v667, 24
        %v1329 = vpop.permute.xlu0 %1328
        %1330 = vrot.lane.b32.xlu0 %v669, 24
        %v1331 = vpop.permute.xlu0 %1330
        %1332 = vrot.lane.b32.xlu0 %v672, 24
        %v1333 = vpop.permute.xlu0 %1332
        %1334 = vrot.lane.b32.xlu0 %v674, 24
        %v1335 = vpop.permute.xlu0 %1334
        %1336 = vrot.lane.b32.xlu0 %v677, 24
        %v1337 = vpop.permute.xlu0 %1336
        %1338 = vrot.lane.b32.xlu0 %v679, 24
        %v1339 = vpop.permute.xlu0 %1338
        %1340 = vrot.lane.b32.xlu0 %v682, 24
        %v1341 = vpop.permute.xlu0 %1340
        %1342 = vrot.lane.b32.xlu0 %v684, 24
        %v1343 = vpop.permute.xlu0 %1342
        %1344 = vrot.lane.b32.xlu0 %v687, 24
        %v1345 = vpop.permute.xlu0 %1344
        %1346 = vrot.lane.b32.xlu0 %v689, 24
        %v1347 = vpop.permute.xlu0 %1346
        %1348 = vrot.lane.b32.xlu0 %v988, 24
        %v1349 = vpop.permute.xlu0 %1348
        %1350 = vrot.lane.b32.xlu0 %v990, 24
        %v1351 = vpop.permute.xlu0 %1350
        %1352 = vrot.lane.b32.xlu0 %v1289, 24
        %v1353 = vpop.permute.xlu0 %1352
        %1354 = vrot.lane.b32.xlu0 %v1291, 24
        %v1355 = vpop.permute.xlu0 %1354
        %v1388 = vsel %vm170, %v323, %v514
        %v1389 = vsel %vm170, %v324, %v516
        %v1390 = vsel %vm170, %v326, %v518
        %v1391 = vsel %vm170, %v327, %v520
        %v1392 = vsel %vm170, %v329, %v522
        %v1393 = vsel %vm170, %v330, %v524
        %v1394 = vsel %vm170, %v332, %v526
        %v1395 = vsel %vm170, %v333, %v528
        %v1396 = vsel %vm170, %v335, %v530
        %v1397 = vsel %vm170, %v336, %v532
        %v1398 = vsel %vm170, %v338, %v534
        %v1399 = vsel %vm170, %v339, %v536
        %v1400 = vsel %vm170, %v341, %v538
        %v1401 = vsel %vm170, %v342, %v540
        %v1402 = vsel %vm170, %v344, %v542
        %v1403 = vsel %vm170, %v345, %v544
        %v1404 = vsel %vm170, %v347, %v546
        %v1405 = vsel %vm170, %v348, %v548
        %v1406 = vsel %vm170, %v350, %v550
        %v1407 = vsel %vm170, %v351, %v552
        %v1408 = vsel %vm170, %v353, %v554
        %v1409 = vsel %vm170, %v354, %v556
        %v1410 = vsel %vm170, %v356, %v558
        %v1411 = vsel %vm170, %v357, %v560
        %v1412 = vsel %vm170, %v359, %v562
        %v1413 = vsel %vm170, %v360, %v564
        %v1414 = vsel %vm170, %v362, %v566
        %v1415 = vsel %vm170, %v363, %v568
        %v1416 = vsel %vm170, %v365, %v570
        %v1417 = vsel %vm170, %v366, %v572
        %v1418 = vsel %vm170, %v368, %v574
        %v1419 = vsel %vm170, %v369, %v576
        %vm1420 = vcmask 48128
        %v1421 = vsel %vm1420, %v1388, %v691
        %v1422 = vsel %vm1420, %v1389, %v693
        %v1423 = vsel %vm1420, %v1390, %v695
        %v1424 = vsel %vm1420, %v1391, %v697
        %v1425 = vsel %vm1420, %v1392, %v699
        %v1426 = vsel %vm1420, %v1393, %v701
        %v1427 = vsel %vm1420, %v1394, %v703
        %v1428 = vsel %vm1420, %v1395, %v705
        %v1429 = vsel %vm1420, %v1396, %v707
        %v1430 = vsel %vm1420, %v1397, %v709
        %v1431 = vsel %vm1420, %v1398, %v711
        %v1432 = vsel %vm1420, %v1399, %v713
        %v1433 = vsel %vm1420, %v1400, %v715
        %v1434 = vsel %vm1420, %v1401, %v717
        %v1435 = vsel %vm1420, %v1402, %v719
        %v1436 = vsel %vm1420, %v1403, %v721
        %v1437 = vsel %vm1420, %v1404, %v723
        %v1438 = vsel %vm1420, %v1405, %v725
        %v1439 = vsel %vm1420, %v1406, %v727
        %v1440 = vsel %vm1420, %v1407, %v729
        %v1441 = vsel %vm1420, %v1408, %v731
        %v1442 = vsel %vm1420, %v1409, %v733
        %v1443 = vsel %vm1420, %v1410, %v735
        %v1444 = vsel %vm1420, %v1411, %v737
        %v1445 = vsel %vm1420, %v1412, %v739
        %v1446 = vsel %vm1420, %v1413, %v741
        %v1447 = vsel %vm1420, %v1414, %v743
        %v1448 = vsel %vm1420, %v1415, %v745
        %v1449 = vsel %vm1420, %v1416, %v747
        %v1450 = vsel %vm1420, %v1417, %v749
        %v1451 = vsel %vm1420, %v1418, %v751
        %v1452 = vsel %vm1420, %v1419, %v753
        %vm1453 = vcmask 72704
        %v1454 = vsel %vm1453, %v1421, %v789
        %v1455 = vsel %vm1453, %v1422, %v791
        %v1456 = vsel %vm1453, %v1423, %v793
        %v1457 = vsel %vm1453, %v1424, %v795
        %v1458 = vsel %vm1453, %v1425, %v797
        %v1459 = vsel %vm1453, %v1426, %v799
        %v1460 = vsel %vm1453, %v1427, %v801
        %v1461 = vsel %vm1453, %v1428, %v803
        %v1462 = vsel %vm1453, %v1429, %v805
        %v1463 = vsel %vm1453, %v1430, %v807
        %v1464 = vsel %vm1453, %v1431, %v809
        %v1465 = vsel %vm1453, %v1432, %v811
        %v1466 = vsel %vm1453, %v1433, %v813
        %v1467 = vsel %vm1453, %v1434, %v815
        %v1468 = vsel %vm1453, %v1435, %v817
        %v1469 = vsel %vm1453, %v1436, %v819
        %v1470 = vsel %vm1453, %v1437, %v821
        %v1471 = vsel %vm1453, %v1438, %v823
        %v1472 = vsel %vm1453, %v1439, %v825
        %v1473 = vsel %vm1453, %v1440, %v827
        %v1474 = vsel %vm1453, %v1441, %v829
        %v1475 = vsel %vm1453, %v1442, %v831
        %v1476 = vsel %vm1453, %v1443, %v833
        %v1477 = vsel %vm1453, %v1444, %v835
        %v1478 = vsel %vm1453, %v1445, %v837
        %v1479 = vsel %vm1453, %v1446, %v839
        %v1480 = vsel %vm1453, %v1447, %v841
        %v1481 = vsel %vm1453, %v1448, %v843
        %v1482 = vsel %vm1453, %v1449, %v845
        %v1483 = vsel %vm1453, %v1450, %v847
        %v1484 = vsel %vm1453, %v1451, %v849
        %v1485 = vsel %vm1453, %v1452, %v851
        %vm1486 = vcmask 97280
        %v1487 = vsel %vm1486, %v1454, %v891
        %v1488 = vsel %vm1486, %v1455, %v893
        %v1489 = vsel %vm1486, %v1456, %v895
        %v1490 = vsel %vm1486, %v1457, %v897
        %v1491 = vsel %vm1486, %v1458, %v899
        %v1492 = vsel %vm1486, %v1459, %v901
        %v1493 = vsel %vm1486, %v1460, %v903
        %v1494 = vsel %vm1486, %v1461, %v905
        %v1495 = vsel %vm1486, %v1462, %v907
        %v1496 = vsel %vm1486, %v1463, %v909
        %v1497 = vsel %vm1486, %v1464, %v911
        %v1498 = vsel %vm1486, %v1465, %v913
        %v1499 = vsel %vm1486, %v1466, %v915
        %v1500 = vsel %vm1486, %v1467, %v917
        %v1501 = vsel %vm1486, %v1468, %v919
        %v1502 = vsel %vm1486, %v1469, %v921
        %v1503 = vsel %vm1486, %v1470, %v923
        %v1504 = vsel %vm1486, %v1471, %v925
        %v1505 = vsel %vm1486, %v1472, %v927
        %v1506 = vsel %vm1486, %v1473, %v929
        %v1507 = vsel %vm1486, %v1474, %v931
        %v1508 = vsel %vm1486, %v1475, %v933
        %v1509 = vsel %vm1486, %v1476, %v935
        %v1510 = vsel %vm1486, %v1477, %v937
        %v1511 = vsel %vm1486, %v1478, %v939
        %v1512 = vsel %vm1486, %v1479, %v941
        %v1513 = vsel %vm1486, %v1480, %v943
        %v1514 = vsel %vm1486, %v1481, %v945
        %v1515 = vsel %vm1486, %v1482, %v947
        %v1516 = vsel %vm1486, %v1483, %v949
        %v1517 = vsel %vm1486, %v1484, %v951
        %v1518 = vsel %vm1486, %v1485, %v953
        %vm1519 = vcmask 121856
        %v1520 = vsel %vm1519, %v1487, %v992
        %v1521 = vsel %vm1519, %v1488, %v994
        %v1522 = vsel %vm1519, %v1489, %v996
        %v1523 = vsel %vm1519, %v1490, %v998
        %v1524 = vsel %vm1519, %v1491, %v1000
        %v1525 = vsel %vm1519, %v1492, %v1002
        %v1526 = vsel %vm1519, %v1493, %v1004
        %v1527 = vsel %vm1519, %v1494, %v1006
        %v1528 = vsel %vm1519, %v1495, %v1008
        %v1529 = vsel %vm1519, %v1496, %v1010
        %v1530 = vsel %vm1519, %v1497, %v1012
        %v1531 = vsel %vm1519, %v1498, %v1014
        %v1532 = vsel %vm1519, %v1499, %v1016
        %v1533 = vsel %vm1519, %v1500, %v1018
        %v1534 = vsel %vm1519, %v1501, %v1020
        %v1535 = vsel %vm1519, %v1502, %v1022
        %v1536 = vsel %vm1519, %v1503, %v1024
        %v1537 = vsel %vm1519, %v1504, %v1026
        %v1538 = vsel %vm1519, %v1505, %v1028
        %v1539 = vsel %vm1519, %v1506, %v1030
        %v1540 = vsel %vm1519, %v1507, %v1032
        %v1541 = vsel %vm1519, %v1508, %v1034
        %v1542 = vsel %vm1519, %v1509, %v1036
        %v1543 = vsel %vm1519, %v1510, %v1038
        %v1544 = vsel %vm1519, %v1511, %v1040
        %v1545 = vsel %vm1519, %v1512, %v1042
        %v1546 = vsel %vm1519, %v1513, %v1044
        %v1547 = vsel %vm1519, %v1514, %v1046
        %v1548 = vsel %vm1519, %v1515, %v1048
        %v1549 = vsel %vm1519, %v1516, %v1050
        %v1550 = vsel %vm1519, %v1517, %v1052
        %v1551 = vsel %vm1519, %v1518, %v1054
        %vm1552 = vcmask 146432
        %v1553 = vsel %vm1552, %v1520, %v1090
        %v1554 = vsel %vm1552, %v1521, %v1092
        %v1555 = vsel %vm1552, %v1522, %v1094
        %v1556 = vsel %vm1552, %v1523, %v1096
        %v1557 = vsel %vm1552, %v1524, %v1098
        %v1558 = vsel %vm1552, %v1525, %v1100
        %v1559 = vsel %vm1552, %v1526, %v1102
        %v1560 = vsel %vm1552, %v1527, %v1104
        %v1561 = vsel %vm1552, %v1528, %v1106
        %v1562 = vsel %vm1552, %v1529, %v1108
        %v1563 = vsel %vm1552, %v1530, %v1110
        %v1564 = vsel %vm1552, %v1531, %v1112
        %v1565 = vsel %vm1552, %v1532, %v1114
        %v1566 = vsel %vm1552, %v1533, %v1116
        %v1567 = vsel %vm1552, %v1534, %v1118
        %v1568 = vsel %vm1552, %v1535, %v1120
        %v1569 = vsel %vm1552, %v1536, %v1122
        %v1570 = vsel %vm1552, %v1537, %v1124
        %v1571 = vsel %vm1552, %v1538, %v1126
        %v1572 = vsel %vm1552, %v1539, %v1128
        %v1573 = vsel %vm1552, %v1540, %v1130
        %v1574 = vsel %vm1552, %v1541, %v1132
        %v1575 = vsel %vm1552, %v1542, %v1134
        %v1576 = vsel %vm1552, %v1543, %v1136
        %v1577 = vsel %vm1552, %v1544, %v1138
        %v1578 = vsel %vm1552, %v1545, %v1140
        %v1579 = vsel %vm1552, %v1546, %v1142
        %v1580 = vsel %vm1552, %v1547, %v1144
        %v1581 = vsel %vm1552, %v1548, %v1146
        %v1582 = vsel %vm1552, %v1549, %v1148
        %v1583 = vsel %vm1552, %v1550, %v1150
        %v1584 = vsel %vm1552, %v1551, %v1152
        %vm1585 = vcmask 171008
        %v1586 = vsel %vm1585, %v1553, %v1192
        %v1587 = vsel %vm1585, %v1554, %v1194
        %v1588 = vsel %vm1585, %v1555, %v1196
        %v1589 = vsel %vm1585, %v1556, %v1198
        %v1590 = vsel %vm1585, %v1557, %v1200
        %v1591 = vsel %vm1585, %v1558, %v1202
        %v1592 = vsel %vm1585, %v1559, %v1204
        %v1593 = vsel %vm1585, %v1560, %v1206
        %v1594 = vsel %vm1585, %v1561, %v1208
        %v1595 = vsel %vm1585, %v1562, %v1210
        %v1596 = vsel %vm1585, %v1563, %v1212
        %v1597 = vsel %vm1585, %v1564, %v1214
        %v1598 = vsel %vm1585, %v1565, %v1216
        %v1599 = vsel %vm1585, %v1566, %v1218
        %v1600 = vsel %vm1585, %v1567, %v1220
        %v1601 = vsel %vm1585, %v1568, %v1222
        %v1602 = vsel %vm1585, %v1569, %v1224
        %v1603 = vsel %vm1585, %v1570, %v1226
        %v1604 = vsel %vm1585, %v1571, %v1228
        %v1605 = vsel %vm1585, %v1572, %v1230
        %v1606 = vsel %vm1585, %v1573, %v1232
        %v1607 = vsel %vm1585, %v1574, %v1234
        %v1608 = vsel %vm1585, %v1575, %v1236
        %v1609 = vsel %vm1585, %v1576, %v1238
        %v1610 = vsel %vm1585, %v1577, %v1240
        %v1611 = vsel %vm1585, %v1578, %v1242
        %v1612 = vsel %vm1585, %v1579, %v1244
        %v1613 = vsel %vm1585, %v1580, %v1246
        %v1614 = vsel %vm1585, %v1581, %v1248
        %v1615 = vsel %vm1585, %v1582, %v1250
        %v1616 = vsel %vm1585, %v1583, %v1252
        %v1617 = vsel %vm1585, %v1584, %v1254
        %vm1618 = vcmask 195584
        %v1619 = vsel %vm1618, %v1586, %v1293
        %v1620 = vsel %vm1618, %v1587, %v1295
        %v1621 = vsel %vm1618, %v1588, %v1297
        %v1622 = vsel %vm1618, %v1589, %v1299
        %v1623 = vsel %vm1618, %v1590, %v1301
        %v1624 = vsel %vm1618, %v1591, %v1303
        %v1625 = vsel %vm1618, %v1592, %v1305
        %v1626 = vsel %vm1618, %v1593, %v1307
        %v1627 = vsel %vm1618, %v1594, %v1309
        %v1628 = vsel %vm1618, %v1595, %v1311
        %v1629 = vsel %vm1618, %v1596, %v1313
        %v1630 = vsel %vm1618, %v1597, %v1315
        %v1631 = vsel %vm1618, %v1598, %v1317
        %v1632 = vsel %vm1618, %v1599, %v1319
        %v1633 = vsel %vm1618, %v1600, %v1321
        %v1634 = vsel %vm1618, %v1601, %v1323
        %v1635 = vsel %vm1618, %v1602, %v1325
        %v1636 = vsel %vm1618, %v1603, %v1327
        %v1637 = vsel %vm1618, %v1604, %v1329
        %v1638 = vsel %vm1618, %v1605, %v1331
        %v1639 = vsel %vm1618, %v1606, %v1333
        %v1640 = vsel %vm1618, %v1607, %v1335
        %v1641 = vsel %vm1618, %v1608, %v1337
        %v1642 = vsel %vm1618, %v1609, %v1339
        %v1643 = vsel %vm1618, %v1610, %v1341
        %v1644 = vsel %vm1618, %v1611, %v1343
        %v1645 = vsel %vm1618, %v1612, %v1345
        %v1646 = vsel %vm1618, %v1613, %v1347
        %v1647 = vsel %vm1618, %v1614, %v1349
        %v1648 = vsel %vm1618, %v1615, %v1351
        %v1649 = vsel %vm1618, %v1616, %v1353
        %v1650 = vsel %vm1618, %v1617, %v1355
        %v1651 = vpack.c.bf16 %v1620, %v1619
        %v1652 = vpack.c.bf16 %v1622, %v1621
        %v1653 = vpack.c.bf16 %v1624, %v1623
        %v1654 = vpack.c.bf16 %v1626, %v1625
        %v1655 = vpack.c.bf16 %v1628, %v1627
        %v1656 = vpack.c.bf16 %v1630, %v1629
        %v1657 = vpack.c.bf16 %v1632, %v1631
        %v1658 = vpack.c.bf16 %v1634, %v1633
        %v1659 = vpack.c.bf16 %v1636, %v1635
        %v1660 = vpack.c.bf16 %v1638, %v1637
        %v1661 = vpack.c.bf16 %v1640, %v1639
        %v1662 = vpack.c.bf16 %v1642, %v1641
        %v1663 = vpack.c.bf16 %v1644, %v1643
        %v1664 = vpack.c.bf16 %v1646, %v1645
        %v1665 = vpack.c.bf16 %v1648, %v1647
        %v1666 = vpack.c.bf16 %v1650, %v1649
        %v1667 = vld [vmem:[%s1] sm:$0xf]
        %v1668 = vld [vmem:[%s1 + $0x4] sm:$0xf]
        %v1669 = vld [vmem:[%s1 + $0x8] sm:$0xf]
        %v1670 = vld [vmem:[%s1 + $0xc] sm:$0x3]
        %v1675 = vunpack.c.l.b16 %v1667
        %v1676 = vunpack.c.l.b16 %v1668
        %v1677 = vunpack.c.l.b16 %v1669
        %v1678 = vunpack.c.l.b16 %v1670
        %v1679 = vpack.c.b16 %v1676, %v1675
        %v1680 = vpack.c.b16 %v1678, %v1677
        %vm1682 = vcmask 220160
        %v1684 = vsel %vm1682, %v1651, 0
        %v1687 = vsel %vm1682, %v1652, 0
        %v1690 = vsel %vm1682, %v1653, 0
        %v1693 = vsel %vm1682, %v1654, 0
        %v1696 = vsel %vm1682, %v1655, 0
        %v1699 = vsel %vm1682, %v1656, 0
        %v1702 = vsel %vm1682, %v1657, 0
        %v1705 = vsel %vm1682, %v1658, 0
        %v1708 = vsel %vm1682, %v1659, 0
        %v1711 = vsel %vm1682, %v1660, 0
        %v1714 = vsel %vm1682, %v1661, 0
        %v1717 = vsel %vm1682, %v1662, 0
        %v1720 = vsel %vm1682, %v1663, 0
        %v1723 = vsel %vm1682, %v1664, 0
        %v1726 = vsel %vm1682, %v1665, 0
        %v1729 = vsel %vm1682, %v1666, 0
        %vm1731 = vcmask 1044480
        %v1732 = vsel %vm1731, 4294967295, 65535
        %v1733 = vsel %vm609, %v1732, 0
        %v1735 = vand.u32 %v1680, %v1733
        %1737 = vmatprep.subr.bf16.mxu0 0
        %1738 = vmatpush1.bf16.msra.mxu0 0
        %1739 = vmatprep.subr.bf16.mxu0 0
        %1740 = vmatpush1.bf16.msra.mxu0 0
        %1741 = vmatprep.subr.bf16.mxu0 0
        %1742 = vmatpush1.bf16.msra.mxu0 0
        %1743 = vmatprep.subr.bf16.mxu0 0
        %1744 = vmatpush1.bf16.msra.mxu0 0
        %1745 = vmatprep.subr.bf16.mxu0 0
        %1746 = vmatpush1.bf16.msra.mxu0 0
        %1747 = vmatprep.subr.bf16.mxu0 0
        %1748 = vmatpush1.bf16.msra.mxu0 0
        %1749 = vmatprep.subr.bf16.mxu0 0
        %1750 = vmatpush1.bf16.msra.mxu0 %v1735
        %1751 = vmatprep.subr.bf16.mxu0 0
        %1752 = vmatpush1.bf16.msra.mxu0 %v1679
        %1753 = vmatprep.subr.bf16.mxu0 0
        %1754 = vmatpush2.bf16.msra.mxu0 0
        %1755 = vmatprep.subr.bf16.mxu0 0
        %1756 = vmatpush2.bf16.msra.mxu0 0
        %1757 = vmatprep.subr.bf16.mxu0 0
        %1758 = vmatpush2.bf16.msra.mxu0 0
        %1759 = vmatprep.subr.bf16.mxu0 0
        %1760 = vmatpush2.bf16.msra.mxu0 0
        %1761 = vmatprep.subr.bf16.mxu0 0
        %1762 = vmatpush2.bf16.msra.mxu0 0
        %1763 = vmatprep.subr.bf16.mxu0 0
        %1764 = vmatpush2.bf16.msra.mxu0 0
        %1765 = vmatprep.subr.bf16.mxu0 0
        %1766 = vmatpush2.bf16.msra.mxu0 0
        %1767 = vmatprep.subr.bf16.mxu0 0
        %1768 = vmatpush2.bf16.msra.mxu0 0
        %1769 = vmatprep.mubr.bf16.mxu0 0
        %1770 = vmatmul.mubr.bf16.gmra.mxu0 %v1684
        %v1771 = vpop.f32.mrf.mxu0
        %v1772 = vadd.f32 0.0, %v1771
        %v1773 = vpop.f32.mrf.mxu0
        %v1774 = vpop.f32.mrf.mxu0
        %v1775 = vadd.f32 0.0, %v1774
        %v1776 = vpop.f32.mrf.mxu0
        %1777 = vmatprep.mubr.bf16.mxu0 0
        %1778 = vmatmul.mubr.bf16.gmra.mxu0 %v1687
        %v1779 = vpop.f32.mrf.mxu0
        %v1780 = vadd.f32 0.0, %v1779
        %v1781 = vpop.f32.mrf.mxu0
        %v1782 = vpop.f32.mrf.mxu0
        %v1783 = vadd.f32 0.0, %v1782
        %v1784 = vpop.f32.mrf.mxu0
        %1785 = vmatprep.mubr.bf16.mxu0 0
        %1786 = vmatmul.mubr.bf16.gmra.mxu0 %v1690
        %v1787 = vpop.f32.mrf.mxu0
        %v1788 = vadd.f32 0.0, %v1787
        %v1789 = vpop.f32.mrf.mxu0
        %v1790 = vpop.f32.mrf.mxu0
        %v1791 = vadd.f32 0.0, %v1790
        %v1792 = vpop.f32.mrf.mxu0
        %1793 = vmatprep.mubr.bf16.mxu0 0
        %1794 = vmatmul.mubr.bf16.gmra.mxu0 %v1693
        %v1795 = vpop.f32.mrf.mxu0
        %v1796 = vadd.f32 0.0, %v1795
        %v1797 = vpop.f32.mrf.mxu0
        %v1798 = vpop.f32.mrf.mxu0
        %v1799 = vadd.f32 0.0, %v1798
        %v1800 = vpop.f32.mrf.mxu0
        %1801 = vmatprep.mubr.bf16.mxu0 0
        %1802 = vmatmul.mubr.bf16.gmra.mxu0 %v1696
        %v1803 = vpop.f32.mrf.mxu0
        %v1804 = vadd.f32 0.0, %v1803
        %v1805 = vpop.f32.mrf.mxu0
        %v1806 = vpop.f32.mrf.mxu0
        %v1807 = vadd.f32 0.0, %v1806
        %v1808 = vpop.f32.mrf.mxu0
        %1809 = vmatprep.mubr.bf16.mxu0 0
        %1810 = vmatmul.mubr.bf16.gmra.mxu0 %v1699
        %v1811 = vpop.f32.mrf.mxu0
        %v1812 = vadd.f32 0.0, %v1811
        %v1813 = vpop.f32.mrf.mxu0
        %v1814 = vpop.f32.mrf.mxu0
        %v1815 = vadd.f32 0.0, %v1814
        %v1816 = vpop.f32.mrf.mxu0
        %1817 = vmatprep.mubr.bf16.mxu0 0
        %1818 = vmatmul.mubr.bf16.gmra.mxu0 %v1702
        %v1819 = vpop.f32.mrf.mxu0
        %v1820 = vadd.f32 0.0, %v1819
        %v1821 = vpop.f32.mrf.mxu0
        %v1822 = vpop.f32.mrf.mxu0
        %v1823 = vadd.f32 0.0, %v1822
        %v1824 = vpop.f32.mrf.mxu0
        %1825 = vmatprep.mubr.bf16.mxu0 0
        %1826 = vmatmul.mubr.bf16.gmra.mxu0 %v1705
        %v1827 = vpop.f32.mrf.mxu0
        %v1828 = vadd.f32 0.0, %v1827
        %v1829 = vpop.f32.mrf.mxu0
        %v1830 = vpop.f32.mrf.mxu0
        %v1831 = vadd.f32 0.0, %v1830
        %v1832 = vpop.f32.mrf.mxu0
        %1833 = vmatprep.mubr.bf16.mxu0 0
        %1834 = vmatmul.mubr.bf16.gmra.mxu0 %v1708
        %v1835 = vpop.f32.mrf.mxu0
        %v1836 = vadd.f32 0.0, %v1835
        %v1837 = vpop.f32.mrf.mxu0
        %v1838 = vpop.f32.mrf.mxu0
        %v1839 = vadd.f32 0.0, %v1838
        %v1840 = vpop.f32.mrf.mxu0
        %1841 = vmatprep.mubr.bf16.mxu0 0
        %1842 = vmatmul.mubr.bf16.gmra.mxu0 %v1711
        %v1843 = vpop.f32.mrf.mxu0
        %v1844 = vadd.f32 0.0, %v1843
        %v1845 = vpop.f32.mrf.mxu0
        %v1846 = vpop.f32.mrf.mxu0
        %v1847 = vadd.f32 0.0, %v1846
        %v1848 = vpop.f32.mrf.mxu0
        %1849 = vmatprep.mubr.bf16.mxu0 0
        %1850 = vmatmul.mubr.bf16.gmra.mxu0 %v1714
        %v1851 = vpop.f32.mrf.mxu0
        %v1852 = vadd.f32 0.0, %v1851
        %v1853 = vpop.f32.mrf.mxu0
        %v1854 = vpop.f32.mrf.mxu0
        %v1855 = vadd.f32 0.0, %v1854
        %v1856 = vpop.f32.mrf.mxu0
        %1857 = vmatprep.mubr.bf16.mxu0 0
        %1858 = vmatmul.mubr.bf16.gmra.mxu0 %v1717
        %v1859 = vpop.f32.mrf.mxu0
        %v1860 = vadd.f32 0.0, %v1859
        %v1861 = vpop.f32.mrf.mxu0
        %v1862 = vpop.f32.mrf.mxu0
        %v1863 = vadd.f32 0.0, %v1862
        %v1864 = vpop.f32.mrf.mxu0
        %1865 = vmatprep.mubr.bf16.mxu0 0
        %1866 = vmatmul.mubr.bf16.gmra.mxu0 %v1720
        %v1867 = vpop.f32.mrf.mxu0
        %v1868 = vadd.f32 0.0, %v1867
        %v1869 = vpop.f32.mrf.mxu0
        %v1870 = vpop.f32.mrf.mxu0
        %v1871 = vadd.f32 0.0, %v1870
        %v1872 = vpop.f32.mrf.mxu0
        %1873 = vmatprep.mubr.bf16.mxu0 0
        %1874 = vmatmul.mubr.bf16.gmra.mxu0 %v1723
        %v1875 = vpop.f32.mrf.mxu0
        %v1876 = vadd.f32 0.0, %v1875
        %v1877 = vpop.f32.mrf.mxu0
        %v1878 = vpop.f32.mrf.mxu0
        %v1879 = vadd.f32 0.0, %v1878
        %v1880 = vpop.f32.mrf.mxu0
        %1881 = vmatprep.mubr.bf16.mxu0 0
        %1882 = vmatmul.mubr.bf16.gmra.mxu0 %v1726
        %v1883 = vpop.f32.mrf.mxu0
        %v1884 = vadd.f32 0.0, %v1883
        %v1885 = vpop.f32.mrf.mxu0
        %v1886 = vpop.f32.mrf.mxu0
        %v1887 = vadd.f32 0.0, %v1886
        %v1888 = vpop.f32.mrf.mxu0
        %1889 = vmatprep.mubr.bf16.mxu0 0
        %1890 = vmatmul.mubr.bf16.gmra.mxu0 %v1729
        %v1891 = vpop.f32.mrf.mxu0
        %v1892 = vadd.f32 0.0, %v1891
        %v1893 = vpop.f32.mrf.mxu0
        %v1894 = vpop.f32.mrf.mxu0
        %v1895 = vadd.f32 0.0, %v1894
        %v1896 = vpop.f32.mrf.mxu0
        %1897 = vdwg.mxu0
        %v1898 = vadd.f32 %v382, %v1772
        %v1899 = vadd.f32 %v382, %v1775
        %v1900 = vadd.f32 %v382, %v1780
        %v1901 = vadd.f32 %v382, %v1783
        %v1902 = vadd.f32 %v382, %v1788
        %v1903 = vadd.f32 %v382, %v1791
        %v1904 = vadd.f32 %v382, %v1796
        %v1905 = vadd.f32 %v382, %v1799
        %v1906 = vadd.f32 %v382, %v1804
        %v1907 = vadd.f32 %v382, %v1807
        %v1908 = vadd.f32 %v382, %v1812
        %v1909 = vadd.f32 %v382, %v1815
        %v1910 = vadd.f32 %v382, %v1820
        %v1911 = vadd.f32 %v382, %v1823
        %v1912 = vadd.f32 %v382, %v1828
        %v1913 = vadd.f32 %v382, %v1831
        %v1914 = vadd.f32 %v382, %v1836
        %v1915 = vadd.f32 %v382, %v1839
        %v1916 = vadd.f32 %v382, %v1844
        %v1917 = vadd.f32 %v382, %v1847
        %v1918 = vadd.f32 %v382, %v1852
        %v1919 = vadd.f32 %v382, %v1855
        %v1920 = vadd.f32 %v382, %v1860
        %v1921 = vadd.f32 %v382, %v1863
        %v1922 = vadd.f32 %v382, %v1868
        %v1923 = vadd.f32 %v382, %v1871
        %v1924 = vadd.f32 %v382, %v1876
        %v1925 = vadd.f32 %v382, %v1879
        %v1926 = vadd.f32 %v382, %v1884
        %v1927 = vadd.f32 %v382, %v1887
        %v1928 = vadd.f32 %v382, %v1892
        %v1929 = vadd.f32 %v382, %v1895
        %v1930 = vmax.f32 %v1898, 0.0
        %v1931 = vmax.f32 %v1899, 0.0
        %v1932 = vmax.f32 %v1900, 0.0
        %v1933 = vmax.f32 %v1901, 0.0
        %v1934 = vmax.f32 %v1902, 0.0
        %v1935 = vmax.f32 %v1903, 0.0
        %v1936 = vmax.f32 %v1904, 0.0
        %v1937 = vmax.f32 %v1905, 0.0
        %v1938 = vmax.f32 %v1906, 0.0
        %v1939 = vmax.f32 %v1907, 0.0
        %v1940 = vmax.f32 %v1908, 0.0
        %v1941 = vmax.f32 %v1909, 0.0
        %v1942 = vmax.f32 %v1910, 0.0
        %v1943 = vmax.f32 %v1911, 0.0
        %v1944 = vmax.f32 %v1912, 0.0
        %v1945 = vmax.f32 %v1913, 0.0
        %v1946 = vmax.f32 %v1914, 0.0
        %v1947 = vmax.f32 %v1915, 0.0
        %v1948 = vmax.f32 %v1916, 0.0
        %v1949 = vmax.f32 %v1917, 0.0
        %v1950 = vmax.f32 %v1918, 0.0
        %v1951 = vmax.f32 %v1919, 0.0
        %v1952 = vmax.f32 %v1920, 0.0
        %v1953 = vmax.f32 %v1921, 0.0
        %v1954 = vmax.f32 %v1922, 0.0
        %v1955 = vmax.f32 %v1923, 0.0
        %v1956 = vmax.f32 %v1924, 0.0
        %v1957 = vmax.f32 %v1925, 0.0
        %v1958 = vmax.f32 %v1926, 0.0
        %v1959 = vmax.f32 %v1927, 0.0
        %v1960 = vmax.f32 %v1928, 0.0
        %v1961 = vmax.f32 %v1929, 0.0
        %v1962 = vpack.c.bf16 %v1931, %v1930
        %v1963 = vpack.c.bf16 %v1933, %v1932
        %v1964 = vpack.c.bf16 %v1935, %v1934
        %v1965 = vpack.c.bf16 %v1937, %v1936
        %v1966 = vpack.c.bf16 %v1939, %v1938
        %v1967 = vpack.c.bf16 %v1941, %v1940
        %v1968 = vpack.c.bf16 %v1943, %v1942
        %v1969 = vpack.c.bf16 %v1945, %v1944
        %v1970 = vpack.c.bf16 %v1947, %v1946
        %v1971 = vpack.c.bf16 %v1949, %v1948
        %v1972 = vpack.c.bf16 %v1951, %v1950
        %v1973 = vpack.c.bf16 %v1953, %v1952
        %v1974 = vpack.c.bf16 %v1955, %v1954
        %v1975 = vpack.c.bf16 %v1957, %v1956
        %v1976 = vpack.c.bf16 %v1959, %v1958
        %v1977 = vpack.c.bf16 %v1961, %v1960
        %v1994 = vunpack.c.l.b16 %v1962
        %v1995 = vunpack.c.h.b16 %v1962
        %v1996 = vunpack.c.l.b16 %v1963
        %v1997 = vunpack.c.h.b16 %v1963
        %v1998 = vunpack.c.l.b16 %v1964
        %v1999 = vunpack.c.h.b16 %v1964
        %v2000 = vunpack.c.l.b16 %v1965
        %v2001 = vunpack.c.h.b16 %v1965
        %v2002 = vunpack.c.l.b16 %v1966
        %v2003 = vunpack.c.h.b16 %v1966
        %v2004 = vunpack.c.l.b16 %v1967
        %v2005 = vunpack.c.h.b16 %v1967
        %v2006 = vunpack.c.l.b16 %v1968
        %v2007 = vunpack.c.h.b16 %v1968
        %v2008 = vunpack.c.l.b16 %v1969
        %v2009 = vunpack.c.h.b16 %v1969
        %v2010 = vunpack.c.l.b16 %v1970
        %v2011 = vunpack.c.h.b16 %v1970
        %v2012 = vunpack.c.l.b16 %v1971
        %v2013 = vunpack.c.h.b16 %v1971
        %v2014 = vunpack.c.l.b16 %v1972
        %v2015 = vunpack.c.h.b16 %v1972
        %v2016 = vunpack.c.l.b16 %v1973
        %v2017 = vunpack.c.h.b16 %v1973
        %v2018 = vunpack.c.l.b16 %v1974
        %v2019 = vunpack.c.h.b16 %v1974
        %v2020 = vunpack.c.l.b16 %v1975
        %v2021 = vunpack.c.h.b16 %v1975
        %v2022 = vunpack.c.l.b16 %v1976
        %v2023 = vunpack.c.h.b16 %v1976
        %v2024 = vunpack.c.l.b16 %v1977
        %v2025 = vunpack.c.h.b16 %v1977
        %v2026 = vpack.c.b16 %v1994, %v1994
        %v2027 = vpack.c.b16 %v1995, %v1995
        %v2028 = vpack.c.b16 %v1996, %v1996
        %v2029 = vpack.c.b16 %v1997, %v1997
        %v2030 = vpack.c.b16 %v1998, %v1998
        %v2031 = vpack.c.b16 %v1999, %v1999
        %v2032 = vpack.c.b16 %v2000, %v2000
        %v2033 = vpack.c.b16 %v2001, %v2001
        %v2034 = vpack.c.b16 %v2002, %v2002
        %v2035 = vpack.c.b16 %v2003, %v2003
        %v2036 = vpack.c.b16 %v2004, %v2004
        %v2037 = vpack.c.b16 %v2005, %v2005
        %v2038 = vpack.c.b16 %v2006, %v2006
        %v2039 = vpack.c.b16 %v2007, %v2007
        %v2040 = vpack.c.b16 %v2008, %v2008
        %v2041 = vpack.c.b16 %v2009, %v2009
        %v2042 = vpack.c.b16 %v2010, %v2010
        %v2043 = vpack.c.b16 %v2011, %v2011
        %v2044 = vpack.c.b16 %v2012, %v2012
        %v2045 = vpack.c.b16 %v2013, %v2013
        %v2046 = vpack.c.b16 %v2014, %v2014
        %v2047 = vpack.c.b16 %v2015, %v2015
        %v2048 = vpack.c.b16 %v2016, %v2016
        %v2049 = vpack.c.b16 %v2017, %v2017
        %v2050 = vpack.c.b16 %v2018, %v2018
        %v2051 = vpack.c.b16 %v2019, %v2019
        %v2052 = vpack.c.b16 %v2020, %v2020
        %v2053 = vpack.c.b16 %v2021, %v2021
        %v2054 = vpack.c.b16 %v2022, %v2022
        %v2055 = vpack.c.b16 %v2023, %v2023
        %v2056 = vpack.c.b16 %v2024, %v2024
        %v2057 = vpack.c.b16 %v2025, %v2025
        %vm2090 = vcmask 519168
        %2091 = vst.msk [vmem:[%s163] sm:$0xf] %vm2090, %v2026
        %2092 = vst.msk [vmem:[%s163 + $0x4] sm:$0xf] %vm2090, %v2027
        %2093 = vst.msk [vmem:[%s163 + $0x8] sm:$0xf] %vm2090, %v2028
        %2094 = vst.msk [vmem:[%s163 + $0xc] sm:$0xf] %vm2090, %v2029
        %2095 = vst.msk [vmem:[%s163 + $0x10] sm:$0xf] %vm2090, %v2030
        %2096 = vst.msk [vmem:[%s163 + $0x14] sm:$0xf] %vm2090, %v2031
        %2097 = vst.msk [vmem:[%s163 + $0x18] sm:$0xf] %vm2090, %v2032
        %2098 = vst.msk [vmem:[%s163 + $0x1c] sm:$0xf] %vm2090, %v2033
        %2099 = vst.msk [vmem:[%s163 + $0x20] sm:$0xf] %vm2090, %v2034
        %2100 = vst.msk [vmem:[%s163 + $0x24] sm:$0xf] %vm2090, %v2035
        %2101 = vst.msk [vmem:[%s163 + $0x28] sm:$0xf] %vm2090, %v2036
        %2102 = vst.msk [vmem:[%s163 + $0x2c] sm:$0xf] %vm2090, %v2037
        %2103 = vst.msk [vmem:[%s163 + $0x30] sm:$0xf] %vm2090, %v2038
        %2104 = vst.msk [vmem:[%s163 + $0x34] sm:$0xf] %vm2090, %v2039
        %2105 = vst.msk [vmem:[%s163 + $0x38] sm:$0xf] %vm2090, %v2040
        %2106 = vst.msk [vmem:[%s163 + $0x3c] sm:$0xf] %vm2090, %v2041
        %2107 = vst.msk [vmem:[%s163 + $0x40] sm:$0xf] %vm2090, %v2042
        %2108 = vst.msk [vmem:[%s163 + $0x44] sm:$0xf] %vm2090, %v2043
        %2109 = vst.msk [vmem:[%s163 + $0x48] sm:$0xf] %vm2090, %v2044
        %2110 = vst.msk [vmem:[%s163 + $0x4c] sm:$0xf] %vm2090, %v2045
        %2111 = vst.msk [vmem:[%s163 + $0x50] sm:$0xf] %vm2090, %v2046
        %2112 = vst.msk [vmem:[%s163 + $0x54] sm:$0xf] %vm2090, %v2047
        %2113 = vst.msk [vmem:[%s163 + $0x58] sm:$0xf] %vm2090, %v2048
        %2114 = vst.msk [vmem:[%s163 + $0x5c] sm:$0xf] %vm2090, %v2049
        %2115 = vst.msk [vmem:[%s163 + $0x60] sm:$0xf] %vm2090, %v2050
        %2116 = vst.msk [vmem:[%s163 + $0x64] sm:$0xf] %vm2090, %v2051
        %2117 = vst.msk [vmem:[%s163 + $0x68] sm:$0xf] %vm2090, %v2052
        %2118 = vst.msk [vmem:[%s163 + $0x6c] sm:$0xf] %vm2090, %v2053
        %2119 = vst.msk [vmem:[%s163 + $0x70] sm:$0xf] %vm2090, %v2054
        %2120 = vst.msk [vmem:[%s163 + $0x74] sm:$0xf] %vm2090, %v2055
        %2121 = vst.msk [vmem:[%s163 + $0x78] sm:$0xf] %vm2090, %v2056
        %2122 = vst.msk [vmem:[%s163 + $0x7c] sm:$0xf] %vm2090, %v2057
        %s2123 = sand.u32 %s93, 1
        %s2124 = scalar_lea.sflag [#allocation4], %s2123
        %s2125 = sand.u32 %s93, 1
        %s2126 = smul.addr %s2125, 128
        %s2127 = scalar_lea.vmem [#allocation3], %s2126
        // Predicated region
        $region33: #{tpu_custom_call.1} parent=31 // pred_check
          %p2128 = pneg %p103
        $region34: #{tpu_custom_call.1} parent=31 // pred_check_branch
          %2130 = sbr.rel (%p2128) target = $region36
        $region35: #{tpu_custom_call.1} parent=31 // pred_region
          %s2132 = ssub.s32 2048, 2048
          %2133 = vsyncadd %s2124, %s2132
          %s2134 = smul.addr %s17, 32
          %s2135 = smul.addr %s2134, 64
          %s2136 = scalar_lea.hbm %s3, %s2135
          %s2137 = sshll.u32 %s2127, 4
          %s2138 = int_to_ptr.vmem [resolvable:$true] %s2137
          %2143 = dma.vmem_to_hbm [thread:$0]  %s2138, 2048, %s2136, %s2124, 64, 64, 4
        $region36: #{tpu_custom_call.1} parent=31 // pred_fallthru
          _
      $region32: #{tpu_custom_call.1} parent=5 // pred_fallthru
        _
      %p2144 = scmp.le.s32.totalorder 2, %s12
      // Predicated region
      $region37: #{tpu_custom_call.1} parent=5 // pred_check
        %p2145 = pneg %p2144
      $region38: #{tpu_custom_call.1} parent=5 // pred_check_branch
        %2147 = sbr.rel (%p2145) target = $region40
      $region39: #{tpu_custom_call.1} parent=5 // pred_region
        %s2148 = ssub.s32 %s12, 2
        // Predicated region
        $region41: #{tpu_custom_call.1} parent=39 // pred_check
          %p2149 = pneg %p109
        $region42: #{tpu_custom_call.1} parent=39 // pred_check_branch
          %2151 = sbr.rel (%p2149) target = $region44
        $region43: #{tpu_custom_call.1} parent=39 // pred_region
          %s2152 = sand.u32 %s94, 1
          %s2153 = scalar_lea.sflag [#allocation4], %s2152
          %s2154 = sand.u32 %s94, 1
          %s2155 = smul.addr %s2154, 128
          %s2156 = scalar_lea.vmem [#allocation3], %s2155
          %2157 = dma.done %s2153, 2048
        $region44: #{tpu_custom_call.1} parent=39 // pred_fallthru
          _
      $region40: #{tpu_custom_call.1} parent=5 // pred_fallthru
        _
    $region6: #{tpu_custom_call.1} parent=1 // loop_footer
      %s16 = sadd.s32 1, %s12
    $region7: #{tpu_custom_call.1} parent=1 // loop_footer_branch
      %11 = sbr.rel target = $region3
    $region8: #{tpu_custom_call.1} parent=1 // loop_exit
      _
    %2158 = vsyncpa [#allocation4], 1
    %s2159 = scalar_lea.sflag [#allocation4], 1
    %2160 = vsyncpa %s2159, 1

</llo_original>
